<compile_context>
chip_gen: v7x
topology: tpu7x:2x2x1
jax: 0.10.0
libtpu: 0.0.40
codegen_flags: <defaults>
</compile_context>

<pallas_src>
import functools
import math

import jax
import jax.numpy as jnp
from jax.experimental import pallas as pl
from jax.experimental.pallas import tpu as pltpu


def _nonlinearity(name):
    # FCBlock supports 'siren' (Sine) and 'sigmoid'; relu kept for convenience.
    return {
        "siren": jnp.sin,
        "sine": jnp.sin,
        "sigmoid": jax.nn.sigmoid,
        "relu": jax.nn.relu,
    }[name]


def _vmem_budget_bytes():
    """~75% of this generation's physical VMEM (headroom for Mosaic scratch +
    pipeline double buffers).  Falls back to 48 MiB (safe on v5e/v6e/v7x)."""
    try:
        phys = int(pltpu.get_tpu_info().vmem_capacity_bytes)
    except Exception:  # noqa: BLE001 - info query not available everywhere
        phys = 64 * 1024 * 1024
    return (phys * 3) // 4


def _fc_kernel(num_hidden_layers, nl_name, outermost_linear,
               x_ref, w1_ref, b1_ref, wl_ref, bl_ref, wo_ref, bo_ref, o_ref):
    """Channel-major MLP: x_ref (in, TM) -> o_ref (out, TM)."""
    nl = _nonlinearity(nl_name)
    cdt = wl_ref.dtype                       # MXU compute dtype (f32 or bf16)
    in_features = w1_ref.shape[1]
    x = x_ref[...]                           # (in, TM), f32, lane-dense

    # ---- first BatchLinear -------------------------------------------------
    if in_features <= 8:
        # K is tiny: an MXU pass would be almost entirely padding, so do the
        # contraction as broadcasted multiply-adds on the VPU (f32).
        w1 = w1_ref[...]                     # (hidden, in), f32
        h = b1_ref[...] + w1[:, 0:1] * x[0:1, :]
        for k in range(1, in_features):
            h = h + w1[:, k:k + 1] * x[k:k + 1, :]
    else:
        h = jnp.dot(w1_ref[...], x.astype(w1_ref.dtype),
                    preferred_element_type=jnp.float32) + b1_ref[...]
    h = nl(h)                                # f32 (hidden, TM)

    # ---- hidden BatchLinear stack (static unroll; depth is small) ----------
    for i in range(num_hidden_layers):
        h = jnp.dot(wl_ref[i], h.astype(cdt),
                    preferred_element_type=jnp.float32) + bl_ref[i]
        h = nl(h)

    # ---- last BatchLinear ----------------------------------------------------
    out = jnp.dot(wo_ref[...], h.astype(cdt),
                  preferred_element_type=jnp.float32) + bo_ref[...]
    if not outermost_linear:
        out = nl(out)
    o_ref[...] = out.astype(o_ref.dtype)


def fcblock_forward(coords, params, *, num_hidden_layers, nonlinearity,
                    outermost_linear=False, compute_dtype=None,
                    tile_m_max=32768, channel_major_output=False):
    """coords: (..., in_features) -> (..., out_features)
       (or (out_features, M) channel-major if channel_major_output=True)."""
    *batch_shape, in_features = coords.shape
    M = math.prod(batch_shape)
    hidden = params["w1"].shape[0]
    out_features = params["wo"].shape[0]
    L = num_hidden_layers

    # bf16 MXU inputs only pay off once the kernel is MXU-bound; SIREN with
    # small hidden is VALU-bound and precision-sensitive, so keep it f32 there.
    if compute_dtype is None:
        compute_dtype = jnp.bfloat16 if hidden >= 128 else jnp.float32
    compute_dtype = jnp.dtype(compute_dtype)

    # Matmul weights in the compute dtype; biases and the tiny first layer f32.
    wl_c = params["wl"].astype(compute_dtype)
    wo_c = params["wo"].astype(compute_dtype)
    w1 = params["w1"].astype(
        jnp.float32 if in_features <= 8 else compute_dtype)
    b1, bl, bo = params["b1"], params["bl"], params["bo"]

    # Channel-major input (in_features, M): points on the lane axis.
    # No padding: Pallas masks the partial last block (columns independent).
    x_cm = jnp.transpose(coords.reshape(M, in_features), (1, 0))

    # ---- tile-size selection (VMEM- and generation-aware) -------------------
    weight_arrays = (w1, b1, wl_c, bl, wo_c, bo)
    weight_bytes = sum(int(a.size) * a.dtype.itemsize for a in weight_arrays)
    budget = _vmem_budget_bytes()
    act_itemsize = compute_dtype.itemsize
    # Per point (column): double-buffered f32 in/out tiles + ~2 live f32
    # activations + ~2 compute-dtype matmul operand copies.
    per_col = (2 * (in_features + out_features) * 4
               + (2 * 4 + 2 * act_itemsize) * hidden)
    tm_vmem = max(128, (budget - 2 * weight_bytes) // per_col // 128 * 128)
    tm_target = max(128, min(int(tile_m_max), int(tm_vmem)))

    # Keep >= 2 grid steps (engages both v7x TensorCores via "parallel"), but
    # never create a tile with zero valid columns.
    max_tiles = pl.cdiv(M, 128)
    num_tiles = min(max(2, pl.cdiv(M, tm_target)), max_tiles)
    tm = pl.cdiv(pl.cdiv(M, num_tiles), 128) * 128
    grid = (pl.cdiv(M, tm),)

    const2 = lambda i: (0, 0)
    const3 = lambda i: (0, 0, 0)
    in_specs = [
        pl.BlockSpec((in_features, tm), lambda i: (0, i)),   # x tile
        pl.BlockSpec(w1.shape, const2),                      # weights: resident
        pl.BlockSpec(b1.shape, const2),
        pl.BlockSpec(wl_c.shape, const3),
        pl.BlockSpec(bl.shape, const3),
        pl.BlockSpec(wo_c.shape, const2),
        pl.BlockSpec(bo.shape, const2),
    ]
    out_specs = pl.BlockSpec((out_features, tm), lambda i: (0, i))

    flops = 2 * M * (in_features * hidden + L * hidden * hidden
                     + hidden * out_features)
    transcendentals = M * (hidden * (L + 1)
                           + (0 if outermost_linear else out_features))
    cost = pl.CostEstimate(
        flops=int(flops),
        transcendentals=int(transcendentals),
        bytes_accessed=int((in_features + out_features) * M * 4 + weight_bytes))

    kernel = functools.partial(_fc_kernel, L, nonlinearity, outermost_linear)
    out_cm = pl.pallas_call(
        kernel,
        grid=grid,
        in_specs=in_specs,
        out_specs=out_specs,
        out_shape=jax.ShapeDtypeStruct((out_features, M), jnp.float32),
        compiler_params=pltpu.CompilerParams(
            dimension_semantics=("parallel",),
            vmem_limit_bytes=int(budget),
        ),
        cost_estimate=cost,
    )(x_cm, w1, b1, wl_c, bl, wo_c, bo)

    if channel_major_output:
        return out_cm                                   # (out_features, M)
    return jnp.transpose(out_cm, (1, 0)).reshape(*batch_shape, out_features)


def _jax_reference(coords, params, *, num_hidden_layers, nonlinearity,
                   outermost_linear=False):
    nl = _nonlinearity(nonlinearity)
    h = coords @ params["w1"].T + params["b1"].reshape(-1)
    h = nl(h)
    for i in range(num_hidden_layers):
        h = h @ params["wl"][i].T + params["bl"][i].reshape(-1)
        h = nl(h)
    out = h @ params["wo"].T + params["bo"].reshape(-1)
    if not outermost_linear:
        out = nl(out)
    return out


def init_params(key, *, in_features, hidden_features, num_hidden_layers,
                out_features, nonlinearity="siren"):
    """Mimics FCBlock init: sine_init / first_layer_sine_init for 'siren',
    xavier-normal for 'sigmoid'; biases keep PyTorch nn.Linear default init."""
    ks = jax.random.split(key, 8)
    f32 = jnp.float32

    def bias(k, fan_in, n_out, *lead):
        bound = 1.0 / math.sqrt(fan_in)
        return jax.random.uniform(k, (*lead, n_out, 1), f32, -bound, bound)

    if nonlinearity in ("siren", "sine"):
        w1 = jax.random.uniform(ks[0], (hidden_features, in_features), f32,
                                -1.0 / in_features, 1.0 / in_features)
        wb = math.sqrt(6.0 / hidden_features) / 30.0
        wl = jax.random.uniform(ks[1], (num_hidden_layers, hidden_features,
                                        hidden_features), f32, -wb, wb)
        wo = jax.random.uniform(ks[2], (out_features, hidden_features), f32,
                                -wb, wb)
    else:  # xavier normal
        def xavier(k, fan_out, fan_in, *lead):
            std = math.sqrt(2.0 / (fan_in + fan_out))
            return std * jax.random.normal(k, (*lead, fan_out, fan_in), f32)
        w1 = xavier(ks[0], hidden_features, in_features)
        wl = xavier(ks[1], hidden_features, hidden_features, num_hidden_layers)
        wo = xavier(ks[2], out_features, hidden_features)

    return {
        "w1": w1,
        "b1": bias(ks[3], in_features, hidden_features),
        "wl": wl,
        "bl": bias(ks[4], hidden_features, hidden_features, num_hidden_layers),
        "wo": wo,
        "bo": bias(ks[5], hidden_features, out_features),
    }


if __name__ == "__main__":
    # Small shapes consistent with FCBlock: coords (B, N, in_features).
    B, N = 2, 128
    in_features, hidden_features, num_hidden_layers, out_features = 2, 32, 3, 3

    key = jax.random.PRNGKey(0)
    kc, kp = jax.random.split(key)
    coords = jax.random.uniform(kc, (B, N, in_features), jnp.float32, -1.0, 1.0)

    ok = True
    for nonlinearity, outermost_linear in (("siren", False), ("sigmoid", True)):
        params = init_params(kp, in_features=in_features,
                             hidden_features=hidden_features,
                             num_hidden_layers=num_hidden_layers,
                             out_features=out_features,
                             nonlinearity=nonlinearity)

        out = fcblock_forward(coords, params,
                              num_hidden_layers=num_hidden_layers,
                              nonlinearity=nonlinearity,
                              outermost_linear=outermost_linear)
        out = jax.block_until_ready(out)
        assert out.shape == (B, N, out_features), out.shape

        ref = jax.block_until_ready(
            _jax_reference(coords, params,
                           num_hidden_layers=num_hidden_layers,
                           nonlinearity=nonlinearity,
                           outermost_linear=outermost_linear))
        err = float(jnp.max(jnp.abs(out - ref)))
        ok = ok and bool(jnp.allclose(out, ref, atol=1e-4, rtol=1e-4))
        assert ok, (nonlinearity, err)

    print("KERNEL_OK")
</pallas_src>

<mosaic_0001>
module attributes {stable_mosaic.version = 11 : i64} {
  func.func @_fc_kernel(%arg0: i32, %arg1: memref<2x128xf32, #tpu.memory_space<vmem>>, %arg2: memref<32x2xf32, #tpu.memory_space<vmem>>, %arg3: memref<32x1xf32, #tpu.memory_space<vmem>>, %arg4: memref<3x32x32xf32, #tpu.memory_space<vmem>>, %arg5: memref<3x32x1xf32, #tpu.memory_space<vmem>>, %arg6: memref<3x32xf32, #tpu.memory_space<vmem>>, %arg7: memref<3x1xf32, #tpu.memory_space<vmem>>, %arg8: memref<3x128xf32, #tpu.memory_space<vmem>>) attributes {dimension_semantics = [#tpu.dimension_semantics<parallel>], iteration_bounds = array<i64: 2>, scalar_prefetch = 0 : i64, scratch_operands = 0 : i64, tpu.core_type = #tpu.core_type<tc>, window_params = [{transform_indices = @transform_0, window_bounds = array<i64: 2, 128>}, {pipeline_mode = #tpu.pipeline_mode<synchronous>, transform_indices = @transform_1, window_bounds = array<i64: 32, 2>}, {pipeline_mode = #tpu.pipeline_mode<synchronous>, transform_indices = @transform_2, window_bounds = array<i64: 32, 1>}, {pipeline_mode = #tpu.pipeline_mode<synchronous>, transform_indices = @transform_3, window_bounds = array<i64: 3, 32, 32>}, {pipeline_mode = #tpu.pipeline_mode<synchronous>, transform_indices = @transform_4, window_bounds = array<i64: 3, 32, 1>}, {pipeline_mode = #tpu.pipeline_mode<synchronous>, transform_indices = @transform_5, window_bounds = array<i64: 3, 32>}, {pipeline_mode = #tpu.pipeline_mode<synchronous>, transform_indices = @transform_6, window_bounds = array<i64: 3, 1>}, {transform_indices = @transform_7, window_bounds = array<i64: 3, 128>}]} {
    %c0 = arith.constant 0 : index
    %c0_0 = arith.constant 0 : index
    %0 = vector.load %arg1[%c0, %c0_0] : memref<2x128xf32, #tpu.memory_space<vmem>>, vector<2x128xf32>
    %c0_1 = arith.constant 0 : index
    %c0_2 = arith.constant 0 : index
    %1 = vector.load %arg2[%c0_1, %c0_2] : memref<32x2xf32, #tpu.memory_space<vmem>>, vector<32x2xf32>
    %c0_3 = arith.constant 0 : index
    %c0_4 = arith.constant 0 : index
    %2 = vector.load %arg3[%c0_3, %c0_4] : memref<32x1xf32, #tpu.memory_space<vmem>>, vector<32x1xf32>
    %3 = vector.extract_strided_slice %1 {offsets = [0, 0], sizes = [32, 1], strides = [1, 1]} : vector<32x2xf32> to vector<32x1xf32>
    %4 = vector.extract_strided_slice %0 {offsets = [0, 0], sizes = [1, 128], strides = [1, 1]} : vector<2x128xf32> to vector<1x128xf32>
    %5 = vector.broadcast %3 : vector<32x1xf32> to vector<32x128xf32>
    %6 = vector.broadcast %4 : vector<1x128xf32> to vector<32x128xf32>
    %7 = arith.mulf %5, %6 : vector<32x128xf32>
    %8 = vector.broadcast %2 : vector<32x1xf32> to vector<32x128xf32>
    %9 = arith.addf %8, %7 : vector<32x128xf32>
    %10 = vector.extract_strided_slice %1 {offsets = [0, 1], sizes = [32, 1], strides = [1, 1]} : vector<32x2xf32> to vector<32x1xf32>
    %11 = vector.extract_strided_slice %0 {offsets = [1, 0], sizes = [1, 128], strides = [1, 1]} : vector<2x128xf32> to vector<1x128xf32>
    %12 = vector.broadcast %10 : vector<32x1xf32> to vector<32x128xf32>
    %13 = vector.broadcast %11 : vector<1x128xf32> to vector<32x128xf32>
    %14 = arith.mulf %12, %13 : vector<32x128xf32>
    %15 = arith.addf %9, %14 : vector<32x128xf32>
    %16 = math.sin %15 : vector<32x128xf32>
    %c0_5 = arith.constant 0 : index
    %c0_6 = arith.constant 0 : index
    %c0_7 = arith.constant 0 : index
    %17 = vector.load %arg4[%c0_5, %c0_6, %c0_7] : memref<3x32x32xf32, #tpu.memory_space<vmem>>, vector<1x32x32xf32>
    %18 = vector.shape_cast %17 : vector<1x32x32xf32> to vector<32x32xf32>
    %cst = arith.constant dense<0.000000e+00> : vector<32x128xf32>
    %19 = tpu.matmul %18, %16, %cst {dimension_numbers = #tpu.dot_dimension_numbers<[1], [0], [0], [1], [0, 0, 1, 1], [], []>} : vector<32x32xf32>, vector<32x128xf32>, vector<32x128xf32> -> vector<32x128xf32>
    %c0_8 = arith.constant 0 : index
    %c0_9 = arith.constant 0 : index
    %c0_10 = arith.constant 0 : index
    %20 = vector.load %arg5[%c0_8, %c0_9, %c0_10] : memref<3x32x1xf32, #tpu.memory_space<vmem>>, vector<1x32x1xf32>
    %21 = vector.shape_cast %20 : vector<1x32x1xf32> to vector<32x1xf32>
    %22 = vector.broadcast %21 : vector<32x1xf32> to vector<32x128xf32>
    %23 = arith.addf %19, %22 : vector<32x128xf32>
    %24 = math.sin %23 : vector<32x128xf32>
    %c1 = arith.constant 1 : index
    %c0_11 = arith.constant 0 : index
    %c0_12 = arith.constant 0 : index
    %25 = vector.load %arg4[%c1, %c0_11, %c0_12] : memref<3x32x32xf32, #tpu.memory_space<vmem>>, vector<1x32x32xf32>
    %26 = vector.shape_cast %25 : vector<1x32x32xf32> to vector<32x32xf32>
    %cst_13 = arith.constant dense<0.000000e+00> : vector<32x128xf32>
    %27 = tpu.matmul %26, %24, %cst_13 {dimension_numbers = #tpu.dot_dimension_numbers<[1], [0], [0], [1], [0, 0, 1, 1], [], []>} : vector<32x32xf32>, vector<32x128xf32>, vector<32x128xf32> -> vector<32x128xf32>
    %c1_14 = arith.constant 1 : index
    %c0_15 = arith.constant 0 : index
    %c0_16 = arith.constant 0 : index
    %28 = vector.load %arg5[%c1_14, %c0_15, %c0_16] : memref<3x32x1xf32, #tpu.memory_space<vmem>>, vector<1x32x1xf32>
    %29 = vector.shape_cast %28 : vector<1x32x1xf32> to vector<32x1xf32>
    %30 = vector.broadcast %29 : vector<32x1xf32> to vector<32x128xf32>
    %31 = arith.addf %27, %30 : vector<32x128xf32>
    %32 = math.sin %31 : vector<32x128xf32>
    %c2 = arith.constant 2 : index
    %c0_17 = arith.constant 0 : index
    %c0_18 = arith.constant 0 : index
    %33 = vector.load %arg4[%c2, %c0_17, %c0_18] : memref<3x32x32xf32, #tpu.memory_space<vmem>>, vector<1x32x32xf32>
    %34 = vector.shape_cast %33 : vector<1x32x32xf32> to vector<32x32xf32>
    %cst_19 = arith.constant dense<0.000000e+00> : vector<32x128xf32>
    %35 = tpu.matmul %34, %32, %cst_19 {dimension_numbers = #tpu.dot_dimension_numbers<[1], [0], [0], [1], [0, 0, 1, 1], [], []>} : vector<32x32xf32>, vector<32x128xf32>, vector<32x128xf32> -> vector<32x128xf32>
    %c2_20 = arith.constant 2 : index
    %c0_21 = arith.constant 0 : index
    %c0_22 = arith.constant 0 : index
    %36 = vector.load %arg5[%c2_20, %c0_21, %c0_22] : memref<3x32x1xf32, #tpu.memory_space<vmem>>, vector<1x32x1xf32>
    %37 = vector.shape_cast %36 : vector<1x32x1xf32> to vector<32x1xf32>
    %38 = vector.broadcast %37 : vector<32x1xf32> to vector<32x128xf32>
    %39 = arith.addf %35, %38 : vector<32x128xf32>
    %40 = math.sin %39 : vector<32x128xf32>
    %c0_23 = arith.constant 0 : index
    %c0_24 = arith.constant 0 : index
    %41 = vector.load %arg6[%c0_23, %c0_24] : memref<3x32xf32, #tpu.memory_space<vmem>>, vector<3x32xf32>
    %cst_25 = arith.constant dense<0.000000e+00> : vector<3x128xf32>
    %42 = tpu.matmul %41, %40, %cst_25 {dimension_numbers = #tpu.dot_dimension_numbers<[1], [0], [0], [1], [0, 0, 1, 1], [], []>} : vector<3x32xf32>, vector<32x128xf32>, vector<3x128xf32> -> vector<3x128xf32>
    %c0_26 = arith.constant 0 : index
    %c0_27 = arith.constant 0 : index
    %43 = vector.load %arg7[%c0_26, %c0_27] : memref<3x1xf32, #tpu.memory_space<vmem>>, vector<3x1xf32>
    %44 = vector.broadcast %43 : vector<3x1xf32> to vector<3x128xf32>
    %45 = arith.addf %42, %44 : vector<3x128xf32>
    %46 = math.sin %45 : vector<3x128xf32>
    %c0_28 = arith.constant 0 : index
    %c0_29 = arith.constant 0 : index
    %47 = vector.load %arg8[%c0_28, %c0_29] : memref<3x128xf32, #tpu.memory_space<vmem>>, vector<3x128xf32>
    tpu.vector_store %arg8[%c0_28, %c0_29], %46 {strides = array<i32>} : memref<3x128xf32, #tpu.memory_space<vmem>>, vector<3x128xf32>,
    return
  }
  func.func @transform_0(%arg0: i32) -> (i32, i32) {
    %c0_i32 = arith.constant 0 : i32
    %c0_i32_0 = arith.constant 0 : i32
    return %c0_i32, %arg0 : i32, i32
  }
  func.func @transform_1(%arg0: i32) -> (i32, i32) {
    %c0_i32 = arith.constant 0 : i32
    %c0_i32_0 = arith.constant 0 : i32
    %c0_i32_1 = arith.constant 0 : i32
    return %c0_i32, %c0_i32_0 : i32, i32
  }
  func.func @transform_2(%arg0: i32) -> (i32, i32) {
    %c0_i32 = arith.constant 0 : i32
    %c0_i32_0 = arith.constant 0 : i32
    %c0_i32_1 = arith.constant 0 : i32
    return %c0_i32, %c0_i32_0 : i32, i32
  }
  func.func @transform_3(%arg0: i32) -> (i32, i32, i32) {
    %c0_i32 = arith.constant 0 : i32
    %c0_i32_0 = arith.constant 0 : i32
    %c0_i32_1 = arith.constant 0 : i32
    %c0_i32_2 = arith.constant 0 : i32
    return %c0_i32, %c0_i32_0, %c0_i32_1 : i32, i32, i32
  }
  func.func @transform_4(%arg0: i32) -> (i32, i32, i32) {
    %c0_i32 = arith.constant 0 : i32
    %c0_i32_0 = arith.constant 0 : i32
    %c0_i32_1 = arith.constant 0 : i32
    %c0_i32_2 = arith.constant 0 : i32
    return %c0_i32, %c0_i32_0, %c0_i32_1 : i32, i32, i32
  }
  func.func @transform_5(%arg0: i32) -> (i32, i32) {
    %c0_i32 = arith.constant 0 : i32
    %c0_i32_0 = arith.constant 0 : i32
    %c0_i32_1 = arith.constant 0 : i32
    return %c0_i32, %c0_i32_0 : i32, i32
  }
  func.func @transform_6(%arg0: i32) -> (i32, i32) {
    %c0_i32 = arith.constant 0 : i32
    %c0_i32_0 = arith.constant 0 : i32
    %c0_i32_1 = arith.constant 0 : i32
    return %c0_i32, %c0_i32_0 : i32, i32
  }
  func.func @transform_7(%arg0: i32) -> (i32, i32) {
    %c0_i32 = arith.constant 0 : i32
    %c0_i32_0 = arith.constant 0 : i32
    return %c0_i32, %arg0 : i32, i32
  }
}

</mosaic_0001>

<llo_original>
// kernel: tpu_custom_call.1
$region0: #{tpu_custom_call.1}
  #allocation0 [shape = 'u32[]', space=smem, size = 0x4, offset = 0x4, fixed_abs, tag = 'smem constant byte address 0x4 - core index']
  #allocation1 [shape = 'u32[144,128]{1,0:T(1,128)}', space=vmem, size = 0x12000, scoped, tag = 'internal scratch']
  %s0 = inlined_call_operand.vmem [shape: f32[2,256], index: 0, kind: input, shape index: {}]
  %s1 = inlined_call_operand.vmem [shape: f32[32,2], index: 1, kind: input, shape index: {}]
  %s2 = inlined_call_operand.vmem [shape: f32[32,1], index: 2, kind: input, shape index: {}]
  %s3 = inlined_call_operand.vmem [shape: f32[3,32,32], index: 3, kind: input, shape index: {}]
  %s4 = inlined_call_operand.vmem [shape: f32[3,32,1], index: 4, kind: input, shape index: {}]
  %s5 = inlined_call_operand.vmem [shape: f32[3,32], index: 5, kind: input, shape index: {}]
  %s6 = inlined_call_operand.vmem [shape: f32[3,1], index: 6, kind: input, shape index: {}]
  %s7 = inlined_call_operand.hbm [shape: f32[3,256], index: 7, kind: output, shape index: {}]
  %s8 = sld [smem:[#allocation0]]
  $region61: #{tpu_custom_call.1} parent=0
    _
  %s10 = ssub.s32 1, %s8
  %s11 = scalar_select 0, %s10, %s8
  $region1: #{tpu_custom_call.1} parent=0
    #allocation2 [shape = 'u8[4096]{0}', space=vmem, size = 0x1000, scoped, tag = 'output window, operand 0']
    #allocation3 [shape = 's32[2]{0}', space=sflag, size = 0x8, scoped, tag = 'scoped memory for tpu_custom_call.1']
    %12 = vsyncpa [#allocation3], 0
    %s13 = scalar_lea.sflag [#allocation3], 1
    %14 = vsyncpa %s13, 0
    loop: start=0, step=1, limit=4
    $region2: #{tpu_custom_call.1} parent=1 // loop_pre_header
      _
    $region3: #{tpu_custom_call.1} parent=1 // loop_header
      %s16 = sphi 0, %s20
      %p17 = scmp.ge.s32.totalorder %s16, 4
      %s26 = sphi 0, %s28
      %s29 = sphi 0, %s26
      %s30 = sphi 0, %s29
      %s46 = sphi 0, %s30
      %s50 = sphi 0, %s50
      %s52 = sphi 0, %s50
      %s53 = sphi 0, %s52
      %s67 = sphi 0, %s53
      %s71 = sphi 0, %s71
      %s73 = sphi 0, %s71
      %s74 = sphi 0, %s73
      %s88 = sphi 0, %s74
      %s92 = sphi 0, %s92
      %s94 = sphi 0, %s92
      %s95 = sphi 0, %s94
      %s109 = sphi 0, %s95
      %s113 = sphi 0, %s113
      %s115 = sphi 0, %s113
      %s116 = sphi 0, %s115
      %s130 = sphi 0, %s116
      %s134 = sphi 0, %s134
      %s136 = sphi 0, %s134
      %s137 = sphi 0, %s136
      %s151 = sphi 0, %s137
      %s155 = sphi 0, %s155
      %s157 = sphi 0, %s155
      %s158 = sphi 0, %s157
      %s172 = sphi 0, %s158
      %s178 = sphi 0, %s180
      %s181 = sphi 0, %s178
      %s182 = sphi 0, %s181
      %s198 = sphi 0, %s182
    $region4: #{tpu_custom_call.1} parent=1 // loop_header_branch
      %19 = sbr.rel (%p17) target = $region8
    $region5: #{tpu_custom_call.1} parent=1 // loop_body
      %s21 = ssub.s32 %s16, 1
      %s22 = ssub.s32 %s16, 2
      %s23 = sadd.s32 %s16, 1
      %s24 = ssub.s32 %s16, %s23
      %p25 = scmp.eq.s32.totalorder %s24, 0
      %s27 = sadd.s32 %s26, 1
      %s28 = scalar_select %p25, %s26, %s27
      %p31 = pneg %p25
      %p32 = scmp.eq.s32.totalorder %s16, 1
      %p33 = por %p31, %p32
      %p34 = scmp.ne.s32.totalorder %s26, %s29
      %p35 = scmp.eq.s32.totalorder %s16, 0
      %p36 = por %p34, %p35
      %p37 = scmp.ne.s32.totalorder %s26, %s29
      %p38 = scmp.eq.s32.totalorder %s21, 1
      %p39 = por %p37, %p38
      %p40 = scmp.ne.s32.totalorder %s29, %s30
      %p41 = scmp.eq.s32.totalorder %s21, 0
      %p42 = por %p40, %p41
      %p43 = scmp.ne.s32.totalorder %s29, %s30
      %p44 = scmp.eq.s32.totalorder %s22, 1
      %p45 = por %p43, %p44
      %p47 = scmp.ne.s32.totalorder %s30, %s46
      %p48 = scmp.eq.s32.totalorder %s22, 0
      %p49 = por %p47, %p48
      %s51 = sadd.s32 %s50, 1
      %p54 = scmp.eq.s32.totalorder %s16, 1
      %p55 = scmp.ne.s32.totalorder %s50, %s52
      %p56 = scmp.eq.s32.totalorder %s16, 0
      %p57 = por %p55, %p56
      %p58 = scmp.ne.s32.totalorder %s50, %s52
      %p59 = scmp.eq.s32.totalorder %s21, 1
      %p60 = por %p58, %p59
      %p61 = scmp.ne.s32.totalorder %s52, %s53
      %p62 = scmp.eq.s32.totalorder %s21, 0
      %p63 = por %p61, %p62
      %p64 = scmp.ne.s32.totalorder %s52, %s53
      %p65 = scmp.eq.s32.totalorder %s22, 1
      %p66 = por %p64, %p65
      %p68 = scmp.ne.s32.totalorder %s53, %s67
      %p69 = scmp.eq.s32.totalorder %s22, 0
      %p70 = por %p68, %p69
      %s72 = sadd.s32 %s71, 1
      %p75 = scmp.eq.s32.totalorder %s16, 1
      %p76 = scmp.ne.s32.totalorder %s71, %s73
      %p77 = scmp.eq.s32.totalorder %s16, 0
      %p78 = por %p76, %p77
      %p79 = scmp.ne.s32.totalorder %s71, %s73
      %p80 = scmp.eq.s32.totalorder %s21, 1
      %p81 = por %p79, %p80
      %p82 = scmp.ne.s32.totalorder %s73, %s74
      %p83 = scmp.eq.s32.totalorder %s21, 0
      %p84 = por %p82, %p83
      %p85 = scmp.ne.s32.totalorder %s73, %s74
      %p86 = scmp.eq.s32.totalorder %s22, 1
      %p87 = por %p85, %p86
      %p89 = scmp.ne.s32.totalorder %s74, %s88
      %p90 = scmp.eq.s32.totalorder %s22, 0
      %p91 = por %p89, %p90
      %s93 = sadd.s32 %s92, 1
      %p96 = scmp.eq.s32.totalorder %s16, 1
      %p97 = scmp.ne.s32.totalorder %s92, %s94
      %p98 = scmp.eq.s32.totalorder %s16, 0
      %p99 = por %p97, %p98
      %p100 = scmp.ne.s32.totalorder %s92, %s94
      %p101 = scmp.eq.s32.totalorder %s21, 1
      %p102 = por %p100, %p101
      %p103 = scmp.ne.s32.totalorder %s94, %s95
      %p104 = scmp.eq.s32.totalorder %s21, 0
      %p105 = por %p103, %p104
      %p106 = scmp.ne.s32.totalorder %s94, %s95
      %p107 = scmp.eq.s32.totalorder %s22, 1
      %p108 = por %p106, %p107
      %p110 = scmp.ne.s32.totalorder %s95, %s109
      %p111 = scmp.eq.s32.totalorder %s22, 0
      %p112 = por %p110, %p111
      %s114 = sadd.s32 %s113, 1
      %p117 = scmp.eq.s32.totalorder %s16, 1
      %p118 = scmp.ne.s32.totalorder %s113, %s115
      %p119 = scmp.eq.s32.totalorder %s16, 0
      %p120 = por %p118, %p119
      %p121 = scmp.ne.s32.totalorder %s113, %s115
      %p122 = scmp.eq.s32.totalorder %s21, 1
      %p123 = por %p121, %p122
      %p124 = scmp.ne.s32.totalorder %s115, %s116
      %p125 = scmp.eq.s32.totalorder %s21, 0
      %p126 = por %p124, %p125
      %p127 = scmp.ne.s32.totalorder %s115, %s116
      %p128 = scmp.eq.s32.totalorder %s22, 1
      %p129 = por %p127, %p128
      %p131 = scmp.ne.s32.totalorder %s116, %s130
      %p132 = scmp.eq.s32.totalorder %s22, 0
      %p133 = por %p131, %p132
      %s135 = sadd.s32 %s134, 1
      %p138 = scmp.eq.s32.totalorder %s16, 1
      %p139 = scmp.ne.s32.totalorder %s134, %s136
      %p140 = scmp.eq.s32.totalorder %s16, 0
      %p141 = por %p139, %p140
      %p142 = scmp.ne.s32.totalorder %s134, %s136
      %p143 = scmp.eq.s32.totalorder %s21, 1
      %p144 = por %p142, %p143
      %p145 = scmp.ne.s32.totalorder %s136, %s137
      %p146 = scmp.eq.s32.totalorder %s21, 0
      %p147 = por %p145, %p146
      %p148 = scmp.ne.s32.totalorder %s136, %s137
      %p149 = scmp.eq.s32.totalorder %s22, 1
      %p150 = por %p148, %p149
      %p152 = scmp.ne.s32.totalorder %s137, %s151
      %p153 = scmp.eq.s32.totalorder %s22, 0
      %p154 = por %p152, %p153
      %s156 = sadd.s32 %s155, 1
      %p159 = scmp.eq.s32.totalorder %s16, 1
      %p160 = scmp.ne.s32.totalorder %s155, %s157
      %p161 = scmp.eq.s32.totalorder %s16, 0
      %p162 = por %p160, %p161
      %p163 = scmp.ne.s32.totalorder %s155, %s157
      %p164 = scmp.eq.s32.totalorder %s21, 1
      %p165 = por %p163, %p164
      %p166 = scmp.ne.s32.totalorder %s157, %s158
      %p167 = scmp.eq.s32.totalorder %s21, 0
      %p168 = por %p166, %p167
      %p169 = scmp.ne.s32.totalorder %s157, %s158
      %p170 = scmp.eq.s32.totalorder %s22, 1
      %p171 = por %p169, %p170
      %p173 = scmp.ne.s32.totalorder %s158, %s172
      %p174 = scmp.eq.s32.totalorder %s22, 0
      %p175 = por %p173, %p174
      %s176 = ssub.s32 %s16, %s23
      %p177 = scmp.eq.s32.totalorder %s176, 0
      %s179 = sadd.s32 %s178, 1
      %s180 = scalar_select %p177, %s178, %s179
      %p183 = pneg %p177
      %p184 = scmp.eq.s32.totalorder %s16, 1
      %p185 = por %p183, %p184
      %p186 = scmp.ne.s32.totalorder %s178, %s181
      %p187 = scmp.eq.s32.totalorder %s16, 0
      %p188 = por %p186, %p187
      %p189 = scmp.ne.s32.totalorder %s178, %s181
      %p190 = scmp.eq.s32.totalorder %s21, 1
      %p191 = por %p189, %p190
      %p192 = scmp.ne.s32.totalorder %s181, %s182
      %p193 = scmp.eq.s32.totalorder %s21, 0
      %p194 = por %p192, %p193
      %p195 = scmp.ne.s32.totalorder %s181, %s182
      %p196 = scmp.eq.s32.totalorder %s22, 1
      %p197 = por %p195, %p196
      %p199 = scmp.ne.s32.totalorder %s182, %s198
      %p200 = scmp.eq.s32.totalorder %s22, 0
      %p201 = por %p199, %p200
      %p202 = scmp.le.s32.totalorder 1, %s16
      %p203 = scmp.lt.s32.totalorder %s16, 3
      %p204 = pnand %p202, %p203
      %p205 = pneg %p204
      // Predicated region
      $region9: #{tpu_custom_call.1} parent=5 // pred_check
        _
      $region10: #{tpu_custom_call.1} parent=5 // pred_check_branch
        %207 = sbr.rel (%p204) target = $region12
      $region11: #{tpu_custom_call.1} parent=5 // pred_region
        %s208 = ssub.s32 %s16, 1
        // Predicated region
        $region13: #{tpu_custom_call.1} parent=11 // pred_check
          %p209 = pneg %p63
        $region14: #{tpu_custom_call.1} parent=11 // pred_check_branch
          %211 = sbr.rel (%p209) target = $region16
        $region15: #{tpu_custom_call.1} parent=11 // pred_region
          _
        $region16: #{tpu_custom_call.1} parent=11 // pred_fallthru
          _
        // Predicated region
        $region17: #{tpu_custom_call.1} parent=11 // pred_check
          %p212 = pneg %p84
        $region18: #{tpu_custom_call.1} parent=11 // pred_check_branch
          %214 = sbr.rel (%p212) target = $region20
        $region19: #{tpu_custom_call.1} parent=11 // pred_region
          _
        $region20: #{tpu_custom_call.1} parent=11 // pred_fallthru
          _
        // Predicated region
        $region21: #{tpu_custom_call.1} parent=11 // pred_check
          %p215 = pneg %p105
        $region22: #{tpu_custom_call.1} parent=11 // pred_check_branch
          %217 = sbr.rel (%p215) target = $region24
        $region23: #{tpu_custom_call.1} parent=11 // pred_region
          _
        $region24: #{tpu_custom_call.1} parent=11 // pred_fallthru
          _
        // Predicated region
        $region25: #{tpu_custom_call.1} parent=11 // pred_check
          %p218 = pneg %p126
        $region26: #{tpu_custom_call.1} parent=11 // pred_check_branch
          %220 = sbr.rel (%p218) target = $region28
        $region27: #{tpu_custom_call.1} parent=11 // pred_region
          _
        $region28: #{tpu_custom_call.1} parent=11 // pred_fallthru
          _
        // Predicated region
        $region29: #{tpu_custom_call.1} parent=11 // pred_check
          %p221 = pneg %p147
        $region30: #{tpu_custom_call.1} parent=11 // pred_check_branch
          %223 = sbr.rel (%p221) target = $region32
        $region31: #{tpu_custom_call.1} parent=11 // pred_region
          _
        $region32: #{tpu_custom_call.1} parent=11 // pred_fallthru
          _
        // Predicated region
        $region33: #{tpu_custom_call.1} parent=11 // pred_check
          %p224 = pneg %p168
        $region34: #{tpu_custom_call.1} parent=11 // pred_check_branch
          %226 = sbr.rel (%p224) target = $region36
        $region35: #{tpu_custom_call.1} parent=11 // pred_region
          _
        $region36: #{tpu_custom_call.1} parent=11 // pred_fallthru
          _
      $region12: #{tpu_custom_call.1} parent=5 // pred_fallthru
        _
      %p227 = scmp.lt.s32.totalorder %s16, 2
      // Predicated region
      $region37: #{tpu_custom_call.1} parent=5 // pred_check
        %p228 = pneg %p227
      $region38: #{tpu_custom_call.1} parent=5 // pred_check_branch
        %230 = sbr.rel (%p228) target = $region40
      $region39: #{tpu_custom_call.1} parent=5 // pred_region
        // Predicated region
        $region41: #{tpu_custom_call.1} parent=39 // pred_check
          %p231 = pneg %p36
        $region42: #{tpu_custom_call.1} parent=39 // pred_check_branch
          %233 = sbr.rel (%p231) target = $region44
        $region43: #{tpu_custom_call.1} parent=39 // pred_region
          %p234 = scmp.lt.s32.totalorder %s16, 1
          %s235 = scalar_select %p234, %s16, 1
          %s236 = smul.addr %s235, 2
          %s237 = scalar_lea.vmem %s0, %s236
        $region44: #{tpu_custom_call.1} parent=39 // pred_fallthru
          _
      $region40: #{tpu_custom_call.1} parent=5 // pred_fallthru
        _
      %p238 = scmp.le.s32.totalorder 1, %s16
      %p239 = scmp.lt.s32.totalorder %s16, 3
      %p240 = pnand %p238, %p239
      %p241 = pneg %p240
      // Predicated region
      $region45: #{tpu_custom_call.1} parent=5 // pred_check
        _
      $region46: #{tpu_custom_call.1} parent=5 // pred_check_branch
        %243 = sbr.rel (%p240) target = $region48
      $region47: #{tpu_custom_call.1} parent=5 // pred_region
        %s244 = ssub.s32 %s16, 1
        %p245 = scmp.lt.s32.totalorder %s21, 1
        %s246 = scalar_select %p245, %s21, 1
        %s247 = smul.addr %s246, 2
        %s248 = scalar_lea.vmem %s0, %s247
        %p249 = pneg %p42
        %p250 = pneg %p39
        %p251 = pneg %p63
        %p252 = pneg %p60
        %p253 = pneg %p84
        %p254 = pneg %p81
        %p255 = pneg %p105
        %p256 = pneg %p102
        %p257 = pneg %p126
        %p258 = pneg %p123
        %p259 = pneg %p147
        %p260 = pneg %p144
        %p261 = pneg %p168
        %p262 = pneg %p165
        %p263 = pneg %p194
        %p264 = pneg %p191
        %s265 = sand.u32 %s181, 1
        %s266 = scalar_lea.sflag [#allocation3], %s265
        %s267 = sand.u32 %s181, 1
        %s268 = smul.addr %s267, 4
        %s269 = scalar_lea.vmem [#allocation2], %s268
        %p270 = scmp.lt.s32.totalorder %s21, 1
        %s271 = scalar_select %p270, %s21, 1
        %s272 = smul.addr %s271, 2
        %s273 = scalar_lea.vmem %s0, %s272
        %v274 = vld [vmem:[%s273] sm:$0x3]
        %v275 = vld [vmem:[%s1] sm:$0xff]
        %v276 = vld [vmem:[%s1 + $0x8] sm:$0xff]
        %v277 = vld [vmem:[%s1 + $0x10] sm:$0xff]
        %v278 = vld [vmem:[%s1 + $0x18] sm:$0xff]
        %v279 = vld [vmem:[%s2] sm:$0xff]
        %v280 = vld [vmem:[%s2 + $0x8] sm:$0xff]
        %v281 = vld [vmem:[%s2 + $0x10] sm:$0xff]
        %v282 = vld [vmem:[%s2 + $0x18] sm:$0xff]
        %284 = vset.pattern.permute.xlu0 0
        %285 = vperm.xlu0 %284, %v275
        %v286 = vpop.permute.xlu0 %285
        %289 = vset.pattern.permute.xlu0 0
        %290 = vperm.xlu0 %289, %v276
        %v291 = vpop.permute.xlu0 %290
        %294 = vset.pattern.permute.xlu0 0
        %295 = vperm.xlu0 %294, %v277
        %v296 = vpop.permute.xlu0 %295
        %299 = vset.pattern.permute.xlu0 0
        %300 = vperm.xlu0 %299, %v278
        %v301 = vpop.permute.xlu0 %300
        %v303 = vlaneseq
        %v304 = vshrl.u32 %v303, 7
        %v305 = vsub.s32 0, %v304
        %v306 = vrot.slane %v274, %v305
        %v307 = vmul.f32 %v286, %v306
        %v308 = vmul.f32 %v291, %v306
        %v309 = vmul.f32 %v296, %v306
        %v310 = vmul.f32 %v301, %v306
        %312 = vset.pattern.permute.xlu0 0
        %313 = vperm.xlu0 %312, %v279
        %v314 = vpop.permute.xlu0 %313
        %317 = vset.pattern.permute.xlu0 0
        %318 = vperm.xlu0 %317, %v280
        %v319 = vpop.permute.xlu0 %318
        %322 = vset.pattern.permute.xlu0 0
        %323 = vperm.xlu0 %322, %v281
        %v324 = vpop.permute.xlu0 %323
        %327 = vset.pattern.permute.xlu0 0
        %328 = vperm.xlu0 %327, %v282
        %v329 = vpop.permute.xlu0 %328
        %v331 = vadd.f32 %v314, %v307
        %v332 = vadd.f32 %v319, %v308
        %v333 = vadd.f32 %v324, %v309
        %v334 = vadd.f32 %v329, %v310
        %335 = vset.pattern.permute.xlu0 1
        %336 = vperm.xlu0 %335, %v275
        %v337 = vpop.permute.xlu0 %336
        %339 = vset.pattern.permute.xlu0 1
        %340 = vperm.xlu0 %339, %v276
        %v341 = vpop.permute.xlu0 %340
        %343 = vset.pattern.permute.xlu0 1
        %344 = vperm.xlu0 %343, %v277
        %v345 = vpop.permute.xlu0 %344
        %347 = vset.pattern.permute.xlu0 1
        %348 = vperm.xlu0 %347, %v278
        %v349 = vpop.permute.xlu0 %348
        %v351 = vlaneseq
        %v352 = vshrl.u32 %v351, 7
        %v353 = vsub.s32 1, %v352
        %v354 = vrot.slane %v274, %v353
        %v355 = vmul.f32 %v337, %v354
        %v356 = vmul.f32 %v341, %v354
        %v357 = vmul.f32 %v345, %v354
        %v358 = vmul.f32 %v349, %v354
        %v359 = vadd.f32 %v331, %v355
        %v360 = vadd.f32 %v332, %v356
        %v361 = vadd.f32 %v333, %v357
        %v362 = vadd.f32 %v334, %v358
        %v363 = vand.u32 2147483647, %v359
        %vm364 = vcmp.le.f32.partialorder %v363, 0.7853982
        %vm365 = vcmp.lt.s32.totalorder %v359, 0
        %v366 = vand.u32 %v359, 2139095040
        %v367 = vshrl.u32 %v366, 23
        %v368 = vsub.s32 %v367, 127
        %v369 = vand.u32 2147483647, %v359
        %v370 = vand.u32 %v369, 8388607
        %v371 = vor.u32 %v370, 8388608
        %v372 = vsub.s32 0, %v371
        %v373 = vadd.s32 %v368, 1
        %vm374 = vcmp.gt.s32.totalorder %v373, 0
        %v375 = vsel %vm374, %v373, 0
        %v376 = vshrl.u32 %v375, 5
        %v377 = vand.u32 %v375, 31
        %v378 = vsub.s32 32, %v377
        %v379 = vshrl.u32 683565275, %v378
        %v380 = vshll.u32 683565275, %v377
        %v381 = vshrl.u32 2475754826, %v378
        %v382 = vor.u32 %v380, %v381
        %v383 = vshll.u32 2475754826, %v377
        %v384 = vshrl.u32 2131351028, %v378
        %v385 = vor.u32 %v383, %v384
        %v386 = vshll.u32 2131351028, %v377
        %v387 = vshrl.u32 2102212464, %v378
        %v388 = vor.u32 %v386, %v387
        %v389 = vshll.u32 2102212464, %v377
        %v390 = vshrl.u32 920167782, %v378
        %v391 = vor.u32 %v389, %v390
        %v392 = vshll.u32 920167782, %v377
        %v393 = vshrl.u32 1326507024, %v378
        %v394 = vor.u32 %v392, %v393
        %vm395 = vcmp.lt.s32.totalorder %v376, 1
        %vm396 = vcmp.lt.s32.totalorder %v376, 2
        %vm397 = vcmp.lt.s32.totalorder %v376, 3
        %vm398 = vcmp.lt.s32.totalorder %v376, 4
        %v399 = vsel %vm395, %v379, %v382
        %v400 = vsel %vm398, %v388, 2102212464
        %v401 = vsel %vm397, %v385, %v400
        %v402 = vsel %vm396, %v399, %v401
        %v403 = vsel %vm395, %v382, %v385
        %v404 = vsel %vm398, %v391, 920167782
        %v405 = vsel %vm397, %v388, %v404
        %v406 = vsel %vm396, %v403, %v405
        %v407 = vsel %vm395, %v385, %v388
        %v408 = vsel %vm398, %v394, 1326507024
        %v409 = vsel %vm397, %v391, %v408
        %v410 = vsel %vm396, %v407, %v409
        %v411 = vshll.u32 %v371, 8
        %v412 = vmul.u32.u64.compose %v411, %v410
        %v413 = vextract.low.u32 %v412
        %v414 = vextract.high.u32 %v412
        %v415 = vmul.u32.u64.compose %v411, %v406
        %v416 = vextract.low.u32 %v415
        %v417 = vextract.high.u32 %v415
        %v418 = vmul.u32 %v411, %v402
        %v419 = vadd.s32 %v414, %v416
        %vm420 = vc.u32 %v414, %v416
        %v421 = vadd.s32 %v417, 1
        %v422 = vsel %vm420, %v421, %v417
        %v423 = vadd.s32 %v418, %v422
        %v424 = vadd.s32 %v423, 536870912
        %v425 = vshrl.u32 %v424, 30
        %v426 = vshll.u32 %v425, 30
        %v427 = vsub.s32 %v423, %v426
        %vm428 = vcmp.lt.s32.totalorder %v427, 0
        %v429 = vsub.s32 0, %v427
        %v430 = vsel %vm428, %v429, %v427
        %v431 = vclz %v430
        %v432 = vsub.s32 %v431, 2
        %vm433 = vcmp.gt.s32.totalorder 0, %v432
        %v434 = vsel %vm433, 0, %v432
        %v435 = vsub.s32 32, %v434
        %v436 = vshll.u32 %v427, %v434
        %v437 = vshrl.u32 %v419, %v435
        %v438 = vor.u32 %v436, %v437
        %v439 = vsub.s32 4294967266, %v434
        %v440 = vadd.s32 %v439, 127
        %v441 = vshll.u32 %v440, 23
        %v442 = vor.u32 4788187, %v441
        %v443 = vand.u32 2147483647, %v442
        %v445 = vcvt.s32.f32 %v438
        %v446 = vmul.f32 %v445, %v443
        %v447 = vxor.u32 %v446, 2147483648
        %v448 = vsel %vm365, %v447, %v446
        %v449 = vsub.s32 4, %v425
        %v450 = vsel %vm365, %v449, %v425
        %v451 = vsel %vm364, %v359, %v448
        %v452 = vsel %vm364, 0, %v450
        %v453 = vcosq.f32.pop %v451
        %v454 = vsinq.f32.pop %v451
        %vm455 = vweird.f32 %v359
        %v456 = vadd.s32 %v452, 3
        %v457 = vand.u32 %v456, 3
        %vm458 = vcmp.lt.s32.totalorder %v457, 2
        %vm459 = vcmp.eq.s32.totalorder %v457, 0
        %v460 = vxor.u32 %v454, 2147483648
        %v461 = vsel %vm459, %v453, %v460
        %vm462 = vcmp.eq.s32.totalorder %v457, 2
        %v463 = vxor.u32 %v453, 2147483648
        %v464 = vsel %vm462, %v463, %v454
        %v465 = vsel %vm458, %v461, %v464
        %v466 = vsel %vm455, nan, %v465
        %v467 = vand.u32 2147483647, %v360
        %vm468 = vcmp.le.f32.partialorder %v467, 0.7853982
        %vm469 = vcmp.lt.s32.totalorder %v360, 0
        %v470 = vand.u32 %v360, 2139095040
        %v471 = vshrl.u32 %v470, 23
        %v472 = vsub.s32 %v471, 127
        %v473 = vand.u32 2147483647, %v360
        %v474 = vand.u32 %v473, 8388607
        %v475 = vor.u32 %v474, 8388608
        %v476 = vsub.s32 0, %v475
        %v477 = vadd.s32 %v472, 1
        %vm478 = vcmp.gt.s32.totalorder %v477, 0
        %v479 = vsel %vm478, %v477, 0
        %v480 = vshrl.u32 %v479, 5
        %v481 = vand.u32 %v479, 31
        %v482 = vsub.s32 32, %v481
        %v483 = vshrl.u32 683565275, %v482
        %v484 = vshll.u32 683565275, %v481
        %v485 = vshrl.u32 2475754826, %v482
        %v486 = vor.u32 %v484, %v485
        %v487 = vshll.u32 2475754826, %v481
        %v488 = vshrl.u32 2131351028, %v482
        %v489 = vor.u32 %v487, %v488
        %v490 = vshll.u32 2131351028, %v481
        %v491 = vshrl.u32 2102212464, %v482
        %v492 = vor.u32 %v490, %v491
        %v493 = vshll.u32 2102212464, %v481
        %v494 = vshrl.u32 920167782, %v482
        %v495 = vor.u32 %v493, %v494
        %v496 = vshll.u32 920167782, %v481
        %v497 = vshrl.u32 1326507024, %v482
        %v498 = vor.u32 %v496, %v497
        %vm499 = vcmp.lt.s32.totalorder %v480, 1
        %vm500 = vcmp.lt.s32.totalorder %v480, 2
        %vm501 = vcmp.lt.s32.totalorder %v480, 3
        %vm502 = vcmp.lt.s32.totalorder %v480, 4
        %v503 = vsel %vm499, %v483, %v486
        %v504 = vsel %vm502, %v492, 2102212464
        %v505 = vsel %vm501, %v489, %v504
        %v506 = vsel %vm500, %v503, %v505
        %v507 = vsel %vm499, %v486, %v489
        %v508 = vsel %vm502, %v495, 920167782
        %v509 = vsel %vm501, %v492, %v508
        %v510 = vsel %vm500, %v507, %v509
        %v511 = vsel %vm499, %v489, %v492
        %v512 = vsel %vm502, %v498, 1326507024
        %v513 = vsel %vm501, %v495, %v512
        %v514 = vsel %vm500, %v511, %v513
        %v515 = vshll.u32 %v475, 8
        %v516 = vmul.u32.u64.compose %v515, %v514
        %v517 = vextract.low.u32 %v516
        %v518 = vextract.high.u32 %v516
        %v519 = vmul.u32.u64.compose %v515, %v510
        %v520 = vextract.low.u32 %v519
        %v521 = vextract.high.u32 %v519
        %v522 = vmul.u32 %v515, %v506
        %v523 = vadd.s32 %v518, %v520
        %vm524 = vc.u32 %v518, %v520
        %v525 = vadd.s32 %v521, 1
        %v526 = vsel %vm524, %v525, %v521
        %v527 = vadd.s32 %v522, %v526
        %v528 = vadd.s32 %v527, 536870912
        %v529 = vshrl.u32 %v528, 30
        %v530 = vshll.u32 %v529, 30
        %v531 = vsub.s32 %v527, %v530
        %vm532 = vcmp.lt.s32.totalorder %v531, 0
        %v533 = vsub.s32 0, %v531
        %v534 = vsel %vm532, %v533, %v531
        %v535 = vclz %v534
        %v536 = vsub.s32 %v535, 2
        %vm537 = vcmp.gt.s32.totalorder 0, %v536
        %v538 = vsel %vm537, 0, %v536
        %v539 = vsub.s32 32, %v538
        %v540 = vshll.u32 %v531, %v538
        %v541 = vshrl.u32 %v523, %v539
        %v542 = vor.u32 %v540, %v541
        %v543 = vsub.s32 4294967266, %v538
        %v544 = vadd.s32 %v543, 127
        %v545 = vshll.u32 %v544, 23
        %v546 = vor.u32 4788187, %v545
        %v547 = vand.u32 2147483647, %v546
        %v549 = vcvt.s32.f32 %v542
        %v550 = vmul.f32 %v549, %v547
        %v551 = vxor.u32 %v550, 2147483648
        %v552 = vsel %vm469, %v551, %v550
        %v553 = vsub.s32 4, %v529
        %v554 = vsel %vm469, %v553, %v529
        %v555 = vsel %vm468, %v360, %v552
        %v556 = vsel %vm468, 0, %v554
        %v557 = vcosq.f32.pop %v555
        %v558 = vsinq.f32.pop %v555
        %vm559 = vweird.f32 %v360
        %v560 = vadd.s32 %v556, 3
        %v561 = vand.u32 %v560, 3
        %vm562 = vcmp.lt.s32.totalorder %v561, 2
        %vm563 = vcmp.eq.s32.totalorder %v561, 0
        %v564 = vxor.u32 %v558, 2147483648
        %v565 = vsel %vm563, %v557, %v564
        %vm566 = vcmp.eq.s32.totalorder %v561, 2
        %v567 = vxor.u32 %v557, 2147483648
        %v568 = vsel %vm566, %v567, %v558
        %v569 = vsel %vm562, %v565, %v568
        %v570 = vsel %vm559, nan, %v569
        %v571 = vand.u32 2147483647, %v361
        %vm572 = vcmp.le.f32.partialorder %v571, 0.7853982
        %vm573 = vcmp.lt.s32.totalorder %v361, 0
        %v574 = vand.u32 %v361, 2139095040
        %v575 = vshrl.u32 %v574, 23
        %v576 = vsub.s32 %v575, 127
        %v577 = vand.u32 2147483647, %v361
        %v578 = vand.u32 %v577, 8388607
        %v579 = vor.u32 %v578, 8388608
        %v580 = vsub.s32 0, %v579
        %v581 = vadd.s32 %v576, 1
        %vm582 = vcmp.gt.s32.totalorder %v581, 0
        %v583 = vsel %vm582, %v581, 0
        %v584 = vshrl.u32 %v583, 5
        %v585 = vand.u32 %v583, 31
        %v586 = vsub.s32 32, %v585
        %v587 = vshrl.u32 683565275, %v586
        %v588 = vshll.u32 683565275, %v585
        %v589 = vshrl.u32 2475754826, %v586
        %v590 = vor.u32 %v588, %v589
        %v591 = vshll.u32 2475754826, %v585
        %v592 = vshrl.u32 2131351028, %v586
        %v593 = vor.u32 %v591, %v592
        %v594 = vshll.u32 2131351028, %v585
        %v595 = vshrl.u32 2102212464, %v586
        %v596 = vor.u32 %v594, %v595
        %v597 = vshll.u32 2102212464, %v585
        %v598 = vshrl.u32 920167782, %v586
        %v599 = vor.u32 %v597, %v598
        %v600 = vshll.u32 920167782, %v585
        %v601 = vshrl.u32 1326507024, %v586
        %v602 = vor.u32 %v600, %v601
        %vm603 = vcmp.lt.s32.totalorder %v584, 1
        %vm604 = vcmp.lt.s32.totalorder %v584, 2
        %vm605 = vcmp.lt.s32.totalorder %v584, 3
        %vm606 = vcmp.lt.s32.totalorder %v584, 4
        %v607 = vsel %vm603, %v587, %v590
        %v608 = vsel %vm606, %v596, 2102212464
        %v609 = vsel %vm605, %v593, %v608
        %v610 = vsel %vm604, %v607, %v609
        %v611 = vsel %vm603, %v590, %v593
        %v612 = vsel %vm606, %v599, 920167782
        %v613 = vsel %vm605, %v596, %v612
        %v614 = vsel %vm604, %v611, %v613
        %v615 = vsel %vm603, %v593, %v596
        %v616 = vsel %vm606, %v602, 1326507024
        %v617 = vsel %vm605, %v599, %v616
        %v618 = vsel %vm604, %v615, %v617
        %v619 = vshll.u32 %v579, 8
        %v620 = vmul.u32.u64.compose %v619, %v618
        %v621 = vextract.low.u32 %v620
        %v622 = vextract.high.u32 %v620
        %v623 = vmul.u32.u64.compose %v619, %v614
        %v624 = vextract.low.u32 %v623
        %v625 = vextract.high.u32 %v623
        %v626 = vmul.u32 %v619, %v610
        %v627 = vadd.s32 %v622, %v624
        %vm628 = vc.u32 %v622, %v624
        %v629 = vadd.s32 %v625, 1
        %v630 = vsel %vm628, %v629, %v625
        %v631 = vadd.s32 %v626, %v630
        %v632 = vadd.s32 %v631, 536870912
        %v633 = vshrl.u32 %v632, 30
        %v634 = vshll.u32 %v633, 30
        %v635 = vsub.s32 %v631, %v634
        %vm636 = vcmp.lt.s32.totalorder %v635, 0
        %v637 = vsub.s32 0, %v635
        %v638 = vsel %vm636, %v637, %v635
        %v639 = vclz %v638
        %v640 = vsub.s32 %v639, 2
        %vm641 = vcmp.gt.s32.totalorder 0, %v640
        %v642 = vsel %vm641, 0, %v640
        %v643 = vsub.s32 32, %v642
        %v644 = vshll.u32 %v635, %v642
        %v645 = vshrl.u32 %v627, %v643
        %v646 = vor.u32 %v644, %v645
        %v647 = vsub.s32 4294967266, %v642
        %v648 = vadd.s32 %v647, 127
        %v649 = vshll.u32 %v648, 23
        %v650 = vor.u32 4788187, %v649
        %v651 = vand.u32 2147483647, %v650
        %v653 = vcvt.s32.f32 %v646
        %v654 = vmul.f32 %v653, %v651
        %v655 = vxor.u32 %v654, 2147483648
        %v656 = vsel %vm573, %v655, %v654
        %v657 = vsub.s32 4, %v633
        %v658 = vsel %vm573, %v657, %v633
        %v659 = vsel %vm572, %v361, %v656
        %v660 = vsel %vm572, 0, %v658
        %v661 = vcosq.f32.pop %v659
        %v662 = vsinq.f32.pop %v659
        %vm663 = vweird.f32 %v361
        %v664 = vadd.s32 %v660, 3
        %v665 = vand.u32 %v664, 3
        %vm666 = vcmp.lt.s32.totalorder %v665, 2
        %vm667 = vcmp.eq.s32.totalorder %v665, 0
        %v668 = vxor.u32 %v662, 2147483648
        %v669 = vsel %vm667, %v661, %v668
        %vm670 = vcmp.eq.s32.totalorder %v665, 2
        %v671 = vxor.u32 %v661, 2147483648
        %v672 = vsel %vm670, %v671, %v662
        %v673 = vsel %vm666, %v669, %v672
        %v674 = vsel %vm663, nan, %v673
        %v675 = vand.u32 2147483647, %v362
        %vm676 = vcmp.le.f32.partialorder %v675, 0.7853982
        %vm677 = vcmp.lt.s32.totalorder %v362, 0
        %v678 = vand.u32 %v362, 2139095040
        %v679 = vshrl.u32 %v678, 23
        %v680 = vsub.s32 %v679, 127
        %v681 = vand.u32 2147483647, %v362
        %v682 = vand.u32 %v681, 8388607
        %v683 = vor.u32 %v682, 8388608
        %v684 = vsub.s32 0, %v683
        %v685 = vadd.s32 %v680, 1
        %vm686 = vcmp.gt.s32.totalorder %v685, 0
        %v687 = vsel %vm686, %v685, 0
        %v688 = vshrl.u32 %v687, 5
        %v689 = vand.u32 %v687, 31
        %v690 = vsub.s32 32, %v689
        %v691 = vshrl.u32 683565275, %v690
        %v692 = vshll.u32 683565275, %v689
        %v693 = vshrl.u32 2475754826, %v690
        %v694 = vor.u32 %v692, %v693
        %v695 = vshll.u32 2475754826, %v689
        %v696 = vshrl.u32 2131351028, %v690
        %v697 = vor.u32 %v695, %v696
        %v698 = vshll.u32 2131351028, %v689
        %v699 = vshrl.u32 2102212464, %v690
        %v700 = vor.u32 %v698, %v699
        %v701 = vshll.u32 2102212464, %v689
        %v702 = vshrl.u32 920167782, %v690
        %v703 = vor.u32 %v701, %v702
        %v704 = vshll.u32 920167782, %v689
        %v705 = vshrl.u32 1326507024, %v690
        %v706 = vor.u32 %v704, %v705
        %vm707 = vcmp.lt.s32.totalorder %v688, 1
        %vm708 = vcmp.lt.s32.totalorder %v688, 2
        %vm709 = vcmp.lt.s32.totalorder %v688, 3
        %vm710 = vcmp.lt.s32.totalorder %v688, 4
        %v711 = vsel %vm707, %v691, %v694
        %v712 = vsel %vm710, %v700, 2102212464
        %v713 = vsel %vm709, %v697, %v712
        %v714 = vsel %vm708, %v711, %v713
        %v715 = vsel %vm707, %v694, %v697
        %v716 = vsel %vm710, %v703, 920167782
        %v717 = vsel %vm709, %v700, %v716
        %v718 = vsel %vm708, %v715, %v717
        %v719 = vsel %vm707, %v697, %v700
        %v720 = vsel %vm710, %v706, 1326507024
        %v721 = vsel %vm709, %v703, %v720
        %v722 = vsel %vm708, %v719, %v721
        %v723 = vshll.u32 %v683, 8
        %v724 = vmul.u32.u64.compose %v723, %v722
        %v725 = vextract.low.u32 %v724
        %v726 = vextract.high.u32 %v724
        %v727 = vmul.u32.u64.compose %v723, %v718
        %v728 = vextract.low.u32 %v727
        %v729 = vextract.high.u32 %v727
        %v730 = vmul.u32 %v723, %v714
        %v731 = vadd.s32 %v726, %v728
        %vm732 = vc.u32 %v726, %v728
        %v733 = vadd.s32 %v729, 1
        %v734 = vsel %vm732, %v733, %v729
        %v735 = vadd.s32 %v730, %v734
        %v736 = vadd.s32 %v735, 536870912
        %v737 = vshrl.u32 %v736, 30
        %v738 = vshll.u32 %v737, 30
        %v739 = vsub.s32 %v735, %v738
        %vm740 = vcmp.lt.s32.totalorder %v739, 0
        %v741 = vsub.s32 0, %v739
        %v742 = vsel %vm740, %v741, %v739
        %v743 = vclz %v742
        %v744 = vsub.s32 %v743, 2
        %vm745 = vcmp.gt.s32.totalorder 0, %v744
        %v746 = vsel %vm745, 0, %v744
        %v747 = vsub.s32 32, %v746
        %v748 = vshll.u32 %v739, %v746
        %v749 = vshrl.u32 %v731, %v747
        %v750 = vor.u32 %v748, %v749
        %v751 = vsub.s32 4294967266, %v746
        %v752 = vadd.s32 %v751, 127
        %v753 = vshll.u32 %v752, 23
        %v754 = vor.u32 4788187, %v753
        %v755 = vand.u32 2147483647, %v754
        %v757 = vcvt.s32.f32 %v750
        %v758 = vmul.f32 %v757, %v755
        %v759 = vxor.u32 %v758, 2147483648
        %v760 = vsel %vm677, %v759, %v758
        %v761 = vsub.s32 4, %v737
        %v762 = vsel %vm677, %v761, %v737
        %v763 = vsel %vm676, %v362, %v760
        %v764 = vsel %vm676, 0, %v762
        %v765 = vcosq.f32.pop %v763
        %v766 = vsinq.f32.pop %v763
        %vm767 = vweird.f32 %v362
        %v768 = vadd.s32 %v764, 3
        %v769 = vand.u32 %v768, 3
        %vm770 = vcmp.lt.s32.totalorder %v769, 2
        %vm771 = vcmp.eq.s32.totalorder %v769, 0
        %v772 = vxor.u32 %v766, 2147483648
        %v773 = vsel %vm771, %v765, %v772
        %vm774 = vcmp.eq.s32.totalorder %v769, 2
        %v775 = vxor.u32 %v765, 2147483648
        %v776 = vsel %vm774, %v775, %v766
        %v777 = vsel %vm770, %v773, %v776
        %v778 = vsel %vm767, nan, %v777
        %v779 = vld [vmem:[%s3] sm:$0xff]
        %v780 = vld [vmem:[%s3 + $0x8] sm:$0xff]
        %v781 = vld [vmem:[%s3 + $0x10] sm:$0xff]
        %v782 = vld [vmem:[%s3 + $0x18] sm:$0xff]
        %v783 = vld [vmem:[%s4] sm:$0xff]
        %v784 = vld [vmem:[%s4 + $0x8] sm:$0xff]
        %v785 = vld [vmem:[%s4 + $0x10] sm:$0xff]
        %v786 = vld [vmem:[%s4 + $0x18] sm:$0xff]
        %788 = vset.pattern.permute.xlu0 0
        %789 = vperm.xlu0 %788, %v783
        %v790 = vpop.permute.xlu0 %789
        %793 = vset.pattern.permute.xlu0 0
        %794 = vperm.xlu0 %793, %v784
        %v795 = vpop.permute.xlu0 %794
        %798 = vset.pattern.permute.xlu0 0
        %799 = vperm.xlu0 %798, %v785
        %v800 = vpop.permute.xlu0 %799
        %803 = vset.pattern.permute.xlu0 0
        %804 = vperm.xlu0 %803, %v786
        %v805 = vpop.permute.xlu0 %804
        %vm807 = vcmask 261120
        %v809 = vsel %vm807, %v779, 0
        %v812 = vsel %vm807, %v780, 0
        %v815 = vsel %vm807, %v781, 0
        %v818 = vsel %vm807, %v782, 0
        %820 = vmatprep.subr.mxu0 0.0
        %821 = vmatpush1.msra.mxu0 %v466
        %822 = vmatprep.subr.mxu0 0.0
        %823 = vmatpush1.msra.mxu0 %v570
        %824 = vmatprep.subr.mxu0 0.0
        %825 = vmatpush1.msra.mxu0 %v674
        %826 = vmatprep.subr.mxu0 0.0
        %827 = vmatpush1.msra.mxu0 %v778
        %828 = vmatprep.subr.mxu0 0.0
        %829 = vmatpush1.msra.mxu0 0.0
        %830 = vmatprep.subr.mxu0 0.0
        %831 = vmatpush1.msra.mxu0 0.0
        %832 = vmatprep.subr.mxu0 0.0
        %833 = vmatpush1.msra.mxu0 0.0
        %834 = vmatprep.subr.mxu0 0.0
        %835 = vmatpush1.msra.mxu0 0.0
        %836 = vmatprep.subr.mxu0 0.0
        %837 = vmatpush1.msra.mxu0 0.0
        %838 = vmatprep.subr.mxu0 0.0
        %839 = vmatpush1.msra.mxu0 0.0
        %840 = vmatprep.subr.mxu0 0.0
        %841 = vmatpush1.msra.mxu0 0.0
        %842 = vmatprep.subr.mxu0 0.0
        %843 = vmatpush1.msra.mxu0 0.0
        %844 = vmatprep.subr.mxu0 0.0
        %845 = vmatpush1.msra.mxu0 0.0
        %846 = vmatprep.subr.mxu0 0.0
        %847 = vmatpush1.msra.mxu0 0.0
        %848 = vmatprep.subr.mxu0 0.0
        %849 = vmatpush1.msra.mxu0 0.0
        %850 = vmatprep.subr.mxu0 0.0
        %851 = vmatpush1.msra.mxu0 0.0
        %852 = vmatprep.subr.mxu0 0.0
        %853 = vmatpush1.msra.mxu0 0.0
        %854 = vmatprep.subr.mxu0 0.0
        %855 = vmatpush1.msra.mxu0 0.0
        %856 = vmatprep.subr.mxu0 0.0
        %857 = vmatpush1.msra.mxu0 0.0
        %858 = vmatprep.subr.mxu0 0.0
        %859 = vmatpush1.msra.mxu0 0.0
        %860 = vmatprep.subr.mxu0 0.0
        %861 = vmatpush1.msra.mxu0 0.0
        %862 = vmatprep.subr.mxu0 0.0
        %863 = vmatpush1.msra.mxu0 0.0
        %864 = vmatprep.subr.mxu0 0.0
        %865 = vmatpush1.msra.mxu0 0.0
        %866 = vmatprep.subr.mxu0 0.0
        %867 = vmatpush1.msra.mxu0 0.0
        %868 = vmatprep.subr.mxu0 0.0
        %869 = vmatpush1.msra.mxu0 0.0
        %870 = vmatprep.subr.mxu0 0.0
        %871 = vmatpush1.msra.mxu0 0.0
        %872 = vmatprep.subr.mxu0 0.0
        %873 = vmatpush1.msra.mxu0 0.0
        %874 = vmatprep.subr.mxu0 0.0
        %875 = vmatpush1.msra.mxu0 0.0
        %876 = vmatprep.subr.mxu0 0.0
        %877 = vmatpush1.msra.mxu0 0.0
        %878 = vmatprep.subr.mxu0 0.0
        %879 = vmatpush1.msra.mxu0 0.0
        %880 = vmatprep.subr.mxu0 0.0
        %881 = vmatpush1.msra.mxu0 0.0
        %882 = vmatprep.subr.mxu0 0.0
        %883 = vmatpush1.msra.mxu0 0.0
        %884 = vmatprep.mubr.f32.mxu0 0.0
        %885 = vmatmul.mubr.f32.gmra.mrb[0].mxu0 %v809
        %v886 = vpop.f32.mrb[0].mxu0
        %v887 = vadd.f32 %v790, %v886
        %v888 = vpop.f32.mrb[0].mxu0
        %889 = vmatprep.mubr.f32.mxu0 0.0
        %890 = vmatmul.mubr.f32.gmra.mrb[0].mxu0 %v812
        %v891 = vpop.f32.mrb[0].mxu0
        %v892 = vadd.f32 %v795, %v891
        %v893 = vpop.f32.mrb[0].mxu0
        %894 = vmatprep.mubr.f32.mxu0 0.0
        %895 = vmatmul.mubr.f32.gmra.mrb[0].mxu0 %v815
        %v896 = vpop.f32.mrb[0].mxu0
        %v897 = vadd.f32 %v800, %v896
        %v898 = vpop.f32.mrb[0].mxu0
        %899 = vmatprep.mubr.f32.mxu0 0.0
        %900 = vmatmul.mubr.f32.gmra.mrb[0].mxu0 %v818
        %v901 = vpop.f32.mrb[0].mxu0
        %v902 = vadd.f32 %v805, %v901
        %v903 = vpop.f32.mrb[0].mxu0
        %904 = vdwg.mxu0
        %v905 = vand.u32 2147483647, %v887
        %vm906 = vcmp.le.f32.partialorder %v905, 0.7853982
        %vm907 = vcmp.lt.s32.totalorder %v887, 0
        %v908 = vand.u32 %v887, 2139095040
        %v909 = vshrl.u32 %v908, 23
        %v910 = vsub.s32 %v909, 127
        %v911 = vand.u32 2147483647, %v887
        %v912 = vand.u32 %v911, 8388607
        %v913 = vor.u32 %v912, 8388608
        %v914 = vsub.s32 0, %v913
        %v915 = vadd.s32 %v910, 1
        %vm916 = vcmp.gt.s32.totalorder %v915, 0
        %v917 = vsel %vm916, %v915, 0
        %v918 = vshrl.u32 %v917, 5
        %v919 = vand.u32 %v917, 31
        %v920 = vsub.s32 32, %v919
        %v921 = vshrl.u32 683565275, %v920
        %v922 = vshll.u32 683565275, %v919
        %v923 = vshrl.u32 2475754826, %v920
        %v924 = vor.u32 %v922, %v923
        %v925 = vshll.u32 2475754826, %v919
        %v926 = vshrl.u32 2131351028, %v920
        %v927 = vor.u32 %v925, %v926
        %v928 = vshll.u32 2131351028, %v919
        %v929 = vshrl.u32 2102212464, %v920
        %v930 = vor.u32 %v928, %v929
        %v931 = vshll.u32 2102212464, %v919
        %v932 = vshrl.u32 920167782, %v920
        %v933 = vor.u32 %v931, %v932
        %v934 = vshll.u32 920167782, %v919
        %v935 = vshrl.u32 1326507024, %v920
        %v936 = vor.u32 %v934, %v935
        %vm937 = vcmp.lt.s32.totalorder %v918, 1
        %vm938 = vcmp.lt.s32.totalorder %v918, 2
        %vm939 = vcmp.lt.s32.totalorder %v918, 3
        %vm940 = vcmp.lt.s32.totalorder %v918, 4
        %v941 = vsel %vm937, %v921, %v924
        %v942 = vsel %vm940, %v930, 2102212464
        %v943 = vsel %vm939, %v927, %v942
        %v944 = vsel %vm938, %v941, %v943
        %v945 = vsel %vm937, %v924, %v927
        %v946 = vsel %vm940, %v933, 920167782
        %v947 = vsel %vm939, %v930, %v946
        %v948 = vsel %vm938, %v945, %v947
        %v949 = vsel %vm937, %v927, %v930
        %v950 = vsel %vm940, %v936, 1326507024
        %v951 = vsel %vm939, %v933, %v950
        %v952 = vsel %vm938, %v949, %v951
        %v953 = vshll.u32 %v913, 8
        %v954 = vmul.u32.u64.compose %v953, %v952
        %v955 = vextract.low.u32 %v954
        %v956 = vextract.high.u32 %v954
        %v957 = vmul.u32.u64.compose %v953, %v948
        %v958 = vextract.low.u32 %v957
        %v959 = vextract.high.u32 %v957
        %v960 = vmul.u32 %v953, %v944
        %v961 = vadd.s32 %v956, %v958
        %vm962 = vc.u32 %v956, %v958
        %v963 = vadd.s32 %v959, 1
        %v964 = vsel %vm962, %v963, %v959
        %v965 = vadd.s32 %v960, %v964
        %v966 = vadd.s32 %v965, 536870912
        %v967 = vshrl.u32 %v966, 30
        %v968 = vshll.u32 %v967, 30
        %v969 = vsub.s32 %v965, %v968
        %vm970 = vcmp.lt.s32.totalorder %v969, 0
        %v971 = vsub.s32 0, %v969
        %v972 = vsel %vm970, %v971, %v969
        %v973 = vclz %v972
        %v974 = vsub.s32 %v973, 2
        %vm975 = vcmp.gt.s32.totalorder 0, %v974
        %v976 = vsel %vm975, 0, %v974
        %v977 = vsub.s32 32, %v976
        %v978 = vshll.u32 %v969, %v976
        %v979 = vshrl.u32 %v961, %v977
        %v980 = vor.u32 %v978, %v979
        %v981 = vsub.s32 4294967266, %v976
        %v982 = vadd.s32 %v981, 127
        %v983 = vshll.u32 %v982, 23
        %v984 = vor.u32 4788187, %v983
        %v985 = vand.u32 2147483647, %v984
        %v987 = vcvt.s32.f32 %v980
        %v988 = vmul.f32 %v987, %v985
        %v989 = vxor.u32 %v988, 2147483648
        %v990 = vsel %vm907, %v989, %v988
        %v991 = vsub.s32 4, %v967
        %v992 = vsel %vm907, %v991, %v967
        %v993 = vsel %vm906, %v887, %v990
        %v994 = vsel %vm906, 0, %v992
        %v995 = vcosq.f32.pop %v993
        %v996 = vsinq.f32.pop %v993
        %vm997 = vweird.f32 %v887
        %v998 = vadd.s32 %v994, 3
        %v999 = vand.u32 %v998, 3
        %vm1000 = vcmp.lt.s32.totalorder %v999, 2
        %vm1001 = vcmp.eq.s32.totalorder %v999, 0
        %v1002 = vxor.u32 %v996, 2147483648
        %v1003 = vsel %vm1001, %v995, %v1002
        %vm1004 = vcmp.eq.s32.totalorder %v999, 2
        %v1005 = vxor.u32 %v995, 2147483648
        %v1006 = vsel %vm1004, %v1005, %v996
        %v1007 = vsel %vm1000, %v1003, %v1006
        %v1008 = vsel %vm997, nan, %v1007
        %v1009 = vand.u32 2147483647, %v892
        %vm1010 = vcmp.le.f32.partialorder %v1009, 0.7853982
        %vm1011 = vcmp.lt.s32.totalorder %v892, 0
        %v1012 = vand.u32 %v892, 2139095040
        %v1013 = vshrl.u32 %v1012, 23
        %v1014 = vsub.s32 %v1013, 127
        %v1015 = vand.u32 2147483647, %v892
        %v1016 = vand.u32 %v1015, 8388607
        %v1017 = vor.u32 %v1016, 8388608
        %v1018 = vsub.s32 0, %v1017
        %v1019 = vadd.s32 %v1014, 1
        %vm1020 = vcmp.gt.s32.totalorder %v1019, 0
        %v1021 = vsel %vm1020, %v1019, 0
        %v1022 = vshrl.u32 %v1021, 5
        %v1023 = vand.u32 %v1021, 31
        %v1024 = vsub.s32 32, %v1023
        %v1025 = vshrl.u32 683565275, %v1024
        %v1026 = vshll.u32 683565275, %v1023
        %v1027 = vshrl.u32 2475754826, %v1024
        %v1028 = vor.u32 %v1026, %v1027
        %v1029 = vshll.u32 2475754826, %v1023
        %v1030 = vshrl.u32 2131351028, %v1024
        %v1031 = vor.u32 %v1029, %v1030
        %v1032 = vshll.u32 2131351028, %v1023
        %v1033 = vshrl.u32 2102212464, %v1024
        %v1034 = vor.u32 %v1032, %v1033
        %v1035 = vshll.u32 2102212464, %v1023
        %v1036 = vshrl.u32 920167782, %v1024
        %v1037 = vor.u32 %v1035, %v1036
        %v1038 = vshll.u32 920167782, %v1023
        %v1039 = vshrl.u32 1326507024, %v1024
        %v1040 = vor.u32 %v1038, %v1039
        %vm1041 = vcmp.lt.s32.totalorder %v1022, 1
        %vm1042 = vcmp.lt.s32.totalorder %v1022, 2
        %vm1043 = vcmp.lt.s32.totalorder %v1022, 3
        %vm1044 = vcmp.lt.s32.totalorder %v1022, 4
        %v1045 = vsel %vm1041, %v1025, %v1028
        %v1046 = vsel %vm1044, %v1034, 2102212464
        %v1047 = vsel %vm1043, %v1031, %v1046
        %v1048 = vsel %vm1042, %v1045, %v1047
        %v1049 = vsel %vm1041, %v1028, %v1031
        %v1050 = vsel %vm1044, %v1037, 920167782
        %v1051 = vsel %vm1043, %v1034, %v1050
        %v1052 = vsel %vm1042, %v1049, %v1051
        %v1053 = vsel %vm1041, %v1031, %v1034
        %v1054 = vsel %vm1044, %v1040, 1326507024
        %v1055 = vsel %vm1043, %v1037, %v1054
        %v1056 = vsel %vm1042, %v1053, %v1055
        %v1057 = vshll.u32 %v1017, 8
        %v1058 = vmul.u32.u64.compose %v1057, %v1056
        %v1059 = vextract.low.u32 %v1058
        %v1060 = vextract.high.u32 %v1058
        %v1061 = vmul.u32.u64.compose %v1057, %v1052
        %v1062 = vextract.low.u32 %v1061
        %v1063 = vextract.high.u32 %v1061
        %v1064 = vmul.u32 %v1057, %v1048
        %v1065 = vadd.s32 %v1060, %v1062
        %vm1066 = vc.u32 %v1060, %v1062
        %v1067 = vadd.s32 %v1063, 1
        %v1068 = vsel %vm1066, %v1067, %v1063
        %v1069 = vadd.s32 %v1064, %v1068
        %v1070 = vadd.s32 %v1069, 536870912
        %v1071 = vshrl.u32 %v1070, 30
        %v1072 = vshll.u32 %v1071, 30
        %v1073 = vsub.s32 %v1069, %v1072
        %vm1074 = vcmp.lt.s32.totalorder %v1073, 0
        %v1075 = vsub.s32 0, %v1073
        %v1076 = vsel %vm1074, %v1075, %v1073
        %v1077 = vclz %v1076
        %v1078 = vsub.s32 %v1077, 2
        %vm1079 = vcmp.gt.s32.totalorder 0, %v1078
        %v1080 = vsel %vm1079, 0, %v1078
        %v1081 = vsub.s32 32, %v1080
        %v1082 = vshll.u32 %v1073, %v1080
        %v1083 = vshrl.u32 %v1065, %v1081
        %v1084 = vor.u32 %v1082, %v1083
        %v1085 = vsub.s32 4294967266, %v1080
        %v1086 = vadd.s32 %v1085, 127
        %v1087 = vshll.u32 %v1086, 23
        %v1088 = vor.u32 4788187, %v1087
        %v1089 = vand.u32 2147483647, %v1088
        %v1091 = vcvt.s32.f32 %v1084
        %v1092 = vmul.f32 %v1091, %v1089
        %v1093 = vxor.u32 %v1092, 2147483648
        %v1094 = vsel %vm1011, %v1093, %v1092
        %v1095 = vsub.s32 4, %v1071
        %v1096 = vsel %vm1011, %v1095, %v1071
        %v1097 = vsel %vm1010, %v892, %v1094
        %v1098 = vsel %vm1010, 0, %v1096
        %v1099 = vcosq.f32.pop %v1097
        %v1100 = vsinq.f32.pop %v1097
        %vm1101 = vweird.f32 %v892
        %v1102 = vadd.s32 %v1098, 3
        %v1103 = vand.u32 %v1102, 3
        %vm1104 = vcmp.lt.s32.totalorder %v1103, 2
        %vm1105 = vcmp.eq.s32.totalorder %v1103, 0
        %v1106 = vxor.u32 %v1100, 2147483648
        %v1107 = vsel %vm1105, %v1099, %v1106
        %vm1108 = vcmp.eq.s32.totalorder %v1103, 2
        %v1109 = vxor.u32 %v1099, 2147483648
        %v1110 = vsel %vm1108, %v1109, %v1100
        %v1111 = vsel %vm1104, %v1107, %v1110
        %v1112 = vsel %vm1101, nan, %v1111
        %v1113 = vand.u32 2147483647, %v897
        %vm1114 = vcmp.le.f32.partialorder %v1113, 0.7853982
        %vm1115 = vcmp.lt.s32.totalorder %v897, 0
        %v1116 = vand.u32 %v897, 2139095040
        %v1117 = vshrl.u32 %v1116, 23
        %v1118 = vsub.s32 %v1117, 127
        %v1119 = vand.u32 2147483647, %v897
        %v1120 = vand.u32 %v1119, 8388607
        %v1121 = vor.u32 %v1120, 8388608
        %v1122 = vsub.s32 0, %v1121
        %v1123 = vadd.s32 %v1118, 1
        %vm1124 = vcmp.gt.s32.totalorder %v1123, 0
        %v1125 = vsel %vm1124, %v1123, 0
        %v1126 = vshrl.u32 %v1125, 5
        %v1127 = vand.u32 %v1125, 31
        %v1128 = vsub.s32 32, %v1127
        %v1129 = vshrl.u32 683565275, %v1128
        %v1130 = vshll.u32 683565275, %v1127
        %v1131 = vshrl.u32 2475754826, %v1128
        %v1132 = vor.u32 %v1130, %v1131
        %v1133 = vshll.u32 2475754826, %v1127
        %v1134 = vshrl.u32 2131351028, %v1128
        %v1135 = vor.u32 %v1133, %v1134
        %v1136 = vshll.u32 2131351028, %v1127
        %v1137 = vshrl.u32 2102212464, %v1128
        %v1138 = vor.u32 %v1136, %v1137
        %v1139 = vshll.u32 2102212464, %v1127
        %v1140 = vshrl.u32 920167782, %v1128
        %v1141 = vor.u32 %v1139, %v1140
        %v1142 = vshll.u32 920167782, %v1127
        %v1143 = vshrl.u32 1326507024, %v1128
        %v1144 = vor.u32 %v1142, %v1143
        %vm1145 = vcmp.lt.s32.totalorder %v1126, 1
        %vm1146 = vcmp.lt.s32.totalorder %v1126, 2
        %vm1147 = vcmp.lt.s32.totalorder %v1126, 3
        %vm1148 = vcmp.lt.s32.totalorder %v1126, 4
        %v1149 = vsel %vm1145, %v1129, %v1132
        %v1150 = vsel %vm1148, %v1138, 2102212464
        %v1151 = vsel %vm1147, %v1135, %v1150
        %v1152 = vsel %vm1146, %v1149, %v1151
        %v1153 = vsel %vm1145, %v1132, %v1135
        %v1154 = vsel %vm1148, %v1141, 920167782
        %v1155 = vsel %vm1147, %v1138, %v1154
        %v1156 = vsel %vm1146, %v1153, %v1155
        %v1157 = vsel %vm1145, %v1135, %v1138
        %v1158 = vsel %vm1148, %v1144, 1326507024
        %v1159 = vsel %vm1147, %v1141, %v1158
        %v1160 = vsel %vm1146, %v1157, %v1159
        %v1161 = vshll.u32 %v1121, 8
        %v1162 = vmul.u32.u64.compose %v1161, %v1160
        %v1163 = vextract.low.u32 %v1162
        %v1164 = vextract.high.u32 %v1162
        %v1165 = vmul.u32.u64.compose %v1161, %v1156
        %v1166 = vextract.low.u32 %v1165
        %v1167 = vextract.high.u32 %v1165
        %v1168 = vmul.u32 %v1161, %v1152
        %v1169 = vadd.s32 %v1164, %v1166
        %vm1170 = vc.u32 %v1164, %v1166
        %v1171 = vadd.s32 %v1167, 1
        %v1172 = vsel %vm1170, %v1171, %v1167
        %v1173 = vadd.s32 %v1168, %v1172
        %v1174 = vadd.s32 %v1173, 536870912
        %v1175 = vshrl.u32 %v1174, 30
        %v1176 = vshll.u32 %v1175, 30
        %v1177 = vsub.s32 %v1173, %v1176
        %vm1178 = vcmp.lt.s32.totalorder %v1177, 0
        %v1179 = vsub.s32 0, %v1177
        %v1180 = vsel %vm1178, %v1179, %v1177
        %v1181 = vclz %v1180
        %v1182 = vsub.s32 %v1181, 2
        %vm1183 = vcmp.gt.s32.totalorder 0, %v1182
        %v1184 = vsel %vm1183, 0, %v1182
        %v1185 = vsub.s32 32, %v1184
        %v1186 = vshll.u32 %v1177, %v1184
        %v1187 = vshrl.u32 %v1169, %v1185
        %v1188 = vor.u32 %v1186, %v1187
        %v1189 = vsub.s32 4294967266, %v1184
        %v1190 = vadd.s32 %v1189, 127
        %v1191 = vshll.u32 %v1190, 23
        %v1192 = vor.u32 4788187, %v1191
        %v1193 = vand.u32 2147483647, %v1192
        %v1195 = vcvt.s32.f32 %v1188
        %v1196 = vmul.f32 %v1195, %v1193
        %v1197 = vxor.u32 %v1196, 2147483648
        %v1198 = vsel %vm1115, %v1197, %v1196
        %v1199 = vsub.s32 4, %v1175
        %v1200 = vsel %vm1115, %v1199, %v1175
        %v1201 = vsel %vm1114, %v897, %v1198
        %v1202 = vsel %vm1114, 0, %v1200
        %v1203 = vcosq.f32.pop %v1201
        %v1204 = vsinq.f32.pop %v1201
        %vm1205 = vweird.f32 %v897
        %v1206 = vadd.s32 %v1202, 3
        %v1207 = vand.u32 %v1206, 3
        %vm1208 = vcmp.lt.s32.totalorder %v1207, 2
        %vm1209 = vcmp.eq.s32.totalorder %v1207, 0
        %v1210 = vxor.u32 %v1204, 2147483648
        %v1211 = vsel %vm1209, %v1203, %v1210
        %vm1212 = vcmp.eq.s32.totalorder %v1207, 2
        %v1213 = vxor.u32 %v1203, 2147483648
        %v1214 = vsel %vm1212, %v1213, %v1204
        %v1215 = vsel %vm1208, %v1211, %v1214
        %v1216 = vsel %vm1205, nan, %v1215
        %v1217 = vand.u32 2147483647, %v902
        %vm1218 = vcmp.le.f32.partialorder %v1217, 0.7853982
        %vm1219 = vcmp.lt.s32.totalorder %v902, 0
        %v1220 = vand.u32 %v902, 2139095040
        %v1221 = vshrl.u32 %v1220, 23
        %v1222 = vsub.s32 %v1221, 127
        %v1223 = vand.u32 2147483647, %v902
        %v1224 = vand.u32 %v1223, 8388607
        %v1225 = vor.u32 %v1224, 8388608
        %v1226 = vsub.s32 0, %v1225
        %v1227 = vadd.s32 %v1222, 1
        %vm1228 = vcmp.gt.s32.totalorder %v1227, 0
        %v1229 = vsel %vm1228, %v1227, 0
        %v1230 = vshrl.u32 %v1229, 5
        %v1231 = vand.u32 %v1229, 31
        %v1232 = vsub.s32 32, %v1231
        %v1233 = vshrl.u32 683565275, %v1232
        %v1234 = vshll.u32 683565275, %v1231
        %v1235 = vshrl.u32 2475754826, %v1232
        %v1236 = vor.u32 %v1234, %v1235
        %v1237 = vshll.u32 2475754826, %v1231
        %v1238 = vshrl.u32 2131351028, %v1232
        %v1239 = vor.u32 %v1237, %v1238
        %v1240 = vshll.u32 2131351028, %v1231
        %v1241 = vshrl.u32 2102212464, %v1232
        %v1242 = vor.u32 %v1240, %v1241
        %v1243 = vshll.u32 2102212464, %v1231
        %v1244 = vshrl.u32 920167782, %v1232
        %v1245 = vor.u32 %v1243, %v1244
        %v1246 = vshll.u32 920167782, %v1231
        %v1247 = vshrl.u32 1326507024, %v1232
        %v1248 = vor.u32 %v1246, %v1247
        %vm1249 = vcmp.lt.s32.totalorder %v1230, 1
        %vm1250 = vcmp.lt.s32.totalorder %v1230, 2
        %vm1251 = vcmp.lt.s32.totalorder %v1230, 3
        %vm1252 = vcmp.lt.s32.totalorder %v1230, 4
        %v1253 = vsel %vm1249, %v1233, %v1236
        %v1254 = vsel %vm1252, %v1242, 2102212464
        %v1255 = vsel %vm1251, %v1239, %v1254
        %v1256 = vsel %vm1250, %v1253, %v1255
        %v1257 = vsel %vm1249, %v1236, %v1239
        %v1258 = vsel %vm1252, %v1245, 920167782
        %v1259 = vsel %vm1251, %v1242, %v1258
        %v1260 = vsel %vm1250, %v1257, %v1259
        %v1261 = vsel %vm1249, %v1239, %v1242
        %v1262 = vsel %vm1252, %v1248, 1326507024
        %v1263 = vsel %vm1251, %v1245, %v1262
        %v1264 = vsel %vm1250, %v1261, %v1263
        %v1265 = vshll.u32 %v1225, 8
        %v1266 = vmul.u32.u64.compose %v1265, %v1264
        %v1267 = vextract.low.u32 %v1266
        %v1268 = vextract.high.u32 %v1266
        %v1269 = vmul.u32.u64.compose %v1265, %v1260
        %v1270 = vextract.low.u32 %v1269
        %v1271 = vextract.high.u32 %v1269
        %v1272 = vmul.u32 %v1265, %v1256
        %v1273 = vadd.s32 %v1268, %v1270
        %vm1274 = vc.u32 %v1268, %v1270
        %v1275 = vadd.s32 %v1271, 1
        %v1276 = vsel %vm1274, %v1275, %v1271
        %v1277 = vadd.s32 %v1272, %v1276
        %v1278 = vadd.s32 %v1277, 536870912
        %v1279 = vshrl.u32 %v1278, 30
        %v1280 = vshll.u32 %v1279, 30
        %v1281 = vsub.s32 %v1277, %v1280
        %vm1282 = vcmp.lt.s32.totalorder %v1281, 0
        %v1283 = vsub.s32 0, %v1281
        %v1284 = vsel %vm1282, %v1283, %v1281
        %v1285 = vclz %v1284
        %v1286 = vsub.s32 %v1285, 2
        %vm1287 = vcmp.gt.s32.totalorder 0, %v1286
        %v1288 = vsel %vm1287, 0, %v1286
        %v1289 = vsub.s32 32, %v1288
        %v1290 = vshll.u32 %v1281, %v1288
        %v1291 = vshrl.u32 %v1273, %v1289
        %v1292 = vor.u32 %v1290, %v1291
        %v1293 = vsub.s32 4294967266, %v1288
        %v1294 = vadd.s32 %v1293, 127
        %v1295 = vshll.u32 %v1294, 23
        %v1296 = vor.u32 4788187, %v1295
        %v1297 = vand.u32 2147483647, %v1296
        %v1299 = vcvt.s32.f32 %v1292
        %v1300 = vmul.f32 %v1299, %v1297
        %v1301 = vxor.u32 %v1300, 2147483648
        %v1302 = vsel %vm1219, %v1301, %v1300
        %v1303 = vsub.s32 4, %v1279
        %v1304 = vsel %vm1219, %v1303, %v1279
        %v1305 = vsel %vm1218, %v902, %v1302
        %v1306 = vsel %vm1218, 0, %v1304
        %v1307 = vcosq.f32.pop %v1305
        %v1308 = vsinq.f32.pop %v1305
        %vm1309 = vweird.f32 %v902
        %v1310 = vadd.s32 %v1306, 3
        %v1311 = vand.u32 %v1310, 3
        %vm1312 = vcmp.lt.s32.totalorder %v1311, 2
        %vm1313 = vcmp.eq.s32.totalorder %v1311, 0
        %v1314 = vxor.u32 %v1308, 2147483648
        %v1315 = vsel %vm1313, %v1307, %v1314
        %vm1316 = vcmp.eq.s32.totalorder %v1311, 2
        %v1317 = vxor.u32 %v1307, 2147483648
        %v1318 = vsel %vm1316, %v1317, %v1308
        %v1319 = vsel %vm1312, %v1315, %v1318
        %v1320 = vsel %vm1309, nan, %v1319
        %s1321 = scalar_lea.vmem %s3, 32
        %v1322 = vld [vmem:[%s1321] sm:$0xff]
        %v1323 = vld [vmem:[%s1321 + $0x8] sm:$0xff]
        %v1324 = vld [vmem:[%s1321 + $0x10] sm:$0xff]
        %v1325 = vld [vmem:[%s1321 + $0x18] sm:$0xff]
        %s1326 = scalar_lea.vmem %s4, 32
        %v1327 = vld [vmem:[%s1326] sm:$0xff]
        %v1328 = vld [vmem:[%s1326 + $0x8] sm:$0xff]
        %v1329 = vld [vmem:[%s1326 + $0x10] sm:$0xff]
        %v1330 = vld [vmem:[%s1326 + $0x18] sm:$0xff]
        %1332 = vset.pattern.permute.xlu0 0
        %1333 = vperm.xlu0 %1332, %v1327
        %v1334 = vpop.permute.xlu0 %1333
        %1337 = vset.pattern.permute.xlu0 0
        %1338 = vperm.xlu0 %1337, %v1328
        %v1339 = vpop.permute.xlu0 %1338
        %1342 = vset.pattern.permute.xlu0 0
        %1343 = vperm.xlu0 %1342, %v1329
        %v1344 = vpop.permute.xlu0 %1343
        %1347 = vset.pattern.permute.xlu0 0
        %1348 = vperm.xlu0 %1347, %v1330
        %v1349 = vpop.permute.xlu0 %1348
        %v1352 = vsel %vm807, %v1322, 0
        %v1355 = vsel %vm807, %v1323, 0
        %v1358 = vsel %vm807, %v1324, 0
        %v1361 = vsel %vm807, %v1325, 0
        %1363 = vmatprep.subr.mxu0 0.0
        %1364 = vmatpush1.msra.mxu0 %v1008
        %1365 = vmatprep.subr.mxu0 0.0
        %1366 = vmatpush1.msra.mxu0 %v1112
        %1367 = vmatprep.subr.mxu0 0.0
        %1368 = vmatpush1.msra.mxu0 %v1216
        %1369 = vmatprep.subr.mxu0 0.0
        %1370 = vmatpush1.msra.mxu0 %v1320
        %1371 = vmatprep.subr.mxu0 0.0
        %1372 = vmatpush1.msra.mxu0 0.0
        %1373 = vmatprep.subr.mxu0 0.0
        %1374 = vmatpush1.msra.mxu0 0.0
        %1375 = vmatprep.subr.mxu0 0.0
        %1376 = vmatpush1.msra.mxu0 0.0
        %1377 = vmatprep.subr.mxu0 0.0
        %1378 = vmatpush1.msra.mxu0 0.0
        %1379 = vmatprep.subr.mxu0 0.0
        %1380 = vmatpush1.msra.mxu0 0.0
        %1381 = vmatprep.subr.mxu0 0.0
        %1382 = vmatpush1.msra.mxu0 0.0
        %1383 = vmatprep.subr.mxu0 0.0
        %1384 = vmatpush1.msra.mxu0 0.0
        %1385 = vmatprep.subr.mxu0 0.0
        %1386 = vmatpush1.msra.mxu0 0.0
        %1387 = vmatprep.subr.mxu0 0.0
        %1388 = vmatpush1.msra.mxu0 0.0
        %1389 = vmatprep.subr.mxu0 0.0
        %1390 = vmatpush1.msra.mxu0 0.0
        %1391 = vmatprep.subr.mxu0 0.0
        %1392 = vmatpush1.msra.mxu0 0.0
        %1393 = vmatprep.subr.mxu0 0.0
        %1394 = vmatpush1.msra.mxu0 0.0
        %1395 = vmatprep.subr.mxu0 0.0
        %1396 = vmatpush1.msra.mxu0 0.0
        %1397 = vmatprep.subr.mxu0 0.0
        %1398 = vmatpush1.msra.mxu0 0.0
        %1399 = vmatprep.subr.mxu0 0.0
        %1400 = vmatpush1.msra.mxu0 0.0
        %1401 = vmatprep.subr.mxu0 0.0
        %1402 = vmatpush1.msra.mxu0 0.0
        %1403 = vmatprep.subr.mxu0 0.0
        %1404 = vmatpush1.msra.mxu0 0.0
        %1405 = vmatprep.subr.mxu0 0.0
        %1406 = vmatpush1.msra.mxu0 0.0
        %1407 = vmatprep.subr.mxu0 0.0
        %1408 = vmatpush1.msra.mxu0 0.0
        %1409 = vmatprep.subr.mxu0 0.0
        %1410 = vmatpush1.msra.mxu0 0.0
        %1411 = vmatprep.subr.mxu0 0.0
        %1412 = vmatpush1.msra.mxu0 0.0
        %1413 = vmatprep.subr.mxu0 0.0
        %1414 = vmatpush1.msra.mxu0 0.0
        %1415 = vmatprep.subr.mxu0 0.0
        %1416 = vmatpush1.msra.mxu0 0.0
        %1417 = vmatprep.subr.mxu0 0.0
        %1418 = vmatpush1.msra.mxu0 0.0
        %1419 = vmatprep.subr.mxu0 0.0
        %1420 = vmatpush1.msra.mxu0 0.0
        %1421 = vmatprep.subr.mxu0 0.0
        %1422 = vmatpush1.msra.mxu0 0.0
        %1423 = vmatprep.subr.mxu0 0.0
        %1424 = vmatpush1.msra.mxu0 0.0
        %1425 = vmatprep.subr.mxu0 0.0
        %1426 = vmatpush1.msra.mxu0 0.0
        %1427 = vmatprep.mubr.f32.mxu0 0.0
        %1428 = vmatmul.mubr.f32.gmra.mrb[0].mxu0 %v1352
        %v1429 = vpop.f32.mrb[0].mxu0
        %v1430 = vadd.f32 %v1334, %v1429
        %v1431 = vpop.f32.mrb[0].mxu0
        %1432 = vmatprep.mubr.f32.mxu0 0.0
        %1433 = vmatmul.mubr.f32.gmra.mrb[0].mxu0 %v1355
        %v1434 = vpop.f32.mrb[0].mxu0
        %v1435 = vadd.f32 %v1339, %v1434
        %v1436 = vpop.f32.mrb[0].mxu0
        %1437 = vmatprep.mubr.f32.mxu0 0.0
        %1438 = vmatmul.mubr.f32.gmra.mrb[0].mxu0 %v1358
        %v1439 = vpop.f32.mrb[0].mxu0
        %v1440 = vadd.f32 %v1344, %v1439
        %v1441 = vpop.f32.mrb[0].mxu0
        %1442 = vmatprep.mubr.f32.mxu0 0.0
        %1443 = vmatmul.mubr.f32.gmra.mrb[0].mxu0 %v1361
        %v1444 = vpop.f32.mrb[0].mxu0
        %v1445 = vadd.f32 %v1349, %v1444
        %v1446 = vpop.f32.mrb[0].mxu0
        %1447 = vdwg.mxu0
        %v1448 = vand.u32 2147483647, %v1430
        %vm1449 = vcmp.le.f32.partialorder %v1448, 0.7853982
        %vm1450 = vcmp.lt.s32.totalorder %v1430, 0
        %v1451 = vand.u32 %v1430, 2139095040
        %v1452 = vshrl.u32 %v1451, 23
        %v1453 = vsub.s32 %v1452, 127
        %v1454 = vand.u32 2147483647, %v1430
        %v1455 = vand.u32 %v1454, 8388607
        %v1456 = vor.u32 %v1455, 8388608
        %v1457 = vsub.s32 0, %v1456
        %v1458 = vadd.s32 %v1453, 1
        %vm1459 = vcmp.gt.s32.totalorder %v1458, 0
        %v1460 = vsel %vm1459, %v1458, 0
        %v1461 = vshrl.u32 %v1460, 5
        %v1462 = vand.u32 %v1460, 31
        %v1463 = vsub.s32 32, %v1462
        %v1464 = vshrl.u32 683565275, %v1463
        %v1465 = vshll.u32 683565275, %v1462
        %v1466 = vshrl.u32 2475754826, %v1463
        %v1467 = vor.u32 %v1465, %v1466
        %v1468 = vshll.u32 2475754826, %v1462
        %v1469 = vshrl.u32 2131351028, %v1463
        %v1470 = vor.u32 %v1468, %v1469
        %v1471 = vshll.u32 2131351028, %v1462
        %v1472 = vshrl.u32 2102212464, %v1463
        %v1473 = vor.u32 %v1471, %v1472
        %v1474 = vshll.u32 2102212464, %v1462
        %v1475 = vshrl.u32 920167782, %v1463
        %v1476 = vor.u32 %v1474, %v1475
        %v1477 = vshll.u32 920167782, %v1462
        %v1478 = vshrl.u32 1326507024, %v1463
        %v1479 = vor.u32 %v1477, %v1478
        %vm1480 = vcmp.lt.s32.totalorder %v1461, 1
        %vm1481 = vcmp.lt.s32.totalorder %v1461, 2
        %vm1482 = vcmp.lt.s32.totalorder %v1461, 3
        %vm1483 = vcmp.lt.s32.totalorder %v1461, 4
        %v1484 = vsel %vm1480, %v1464, %v1467
        %v1485 = vsel %vm1483, %v1473, 2102212464
        %v1486 = vsel %vm1482, %v1470, %v1485
        %v1487 = vsel %vm1481, %v1484, %v1486
        %v1488 = vsel %vm1480, %v1467, %v1470
        %v1489 = vsel %vm1483, %v1476, 920167782
        %v1490 = vsel %vm1482, %v1473, %v1489
        %v1491 = vsel %vm1481, %v1488, %v1490
        %v1492 = vsel %vm1480, %v1470, %v1473
        %v1493 = vsel %vm1483, %v1479, 1326507024
        %v1494 = vsel %vm1482, %v1476, %v1493
        %v1495 = vsel %vm1481, %v1492, %v1494
        %v1496 = vshll.u32 %v1456, 8
        %v1497 = vmul.u32.u64.compose %v1496, %v1495
        %v1498 = vextract.low.u32 %v1497
        %v1499 = vextract.high.u32 %v1497
        %v1500 = vmul.u32.u64.compose %v1496, %v1491
        %v1501 = vextract.low.u32 %v1500
        %v1502 = vextract.high.u32 %v1500
        %v1503 = vmul.u32 %v1496, %v1487
        %v1504 = vadd.s32 %v1499, %v1501
        %vm1505 = vc.u32 %v1499, %v1501
        %v1506 = vadd.s32 %v1502, 1
        %v1507 = vsel %vm1505, %v1506, %v1502
        %v1508 = vadd.s32 %v1503, %v1507
        %v1509 = vadd.s32 %v1508, 536870912
        %v1510 = vshrl.u32 %v1509, 30
        %v1511 = vshll.u32 %v1510, 30
        %v1512 = vsub.s32 %v1508, %v1511
        %vm1513 = vcmp.lt.s32.totalorder %v1512, 0
        %v1514 = vsub.s32 0, %v1512
        %v1515 = vsel %vm1513, %v1514, %v1512
        %v1516 = vclz %v1515
        %v1517 = vsub.s32 %v1516, 2
        %vm1518 = vcmp.gt.s32.totalorder 0, %v1517
        %v1519 = vsel %vm1518, 0, %v1517
        %v1520 = vsub.s32 32, %v1519
        %v1521 = vshll.u32 %v1512, %v1519
        %v1522 = vshrl.u32 %v1504, %v1520
        %v1523 = vor.u32 %v1521, %v1522
        %v1524 = vsub.s32 4294967266, %v1519
        %v1525 = vadd.s32 %v1524, 127
        %v1526 = vshll.u32 %v1525, 23
        %v1527 = vor.u32 4788187, %v1526
        %v1528 = vand.u32 2147483647, %v1527
        %v1530 = vcvt.s32.f32 %v1523
        %v1531 = vmul.f32 %v1530, %v1528
        %v1532 = vxor.u32 %v1531, 2147483648
        %v1533 = vsel %vm1450, %v1532, %v1531
        %v1534 = vsub.s32 4, %v1510
        %v1535 = vsel %vm1450, %v1534, %v1510
        %v1536 = vsel %vm1449, %v1430, %v1533
        %v1537 = vsel %vm1449, 0, %v1535
        %v1538 = vcosq.f32.pop %v1536
        %v1539 = vsinq.f32.pop %v1536
        %vm1540 = vweird.f32 %v1430
        %v1541 = vadd.s32 %v1537, 3
        %v1542 = vand.u32 %v1541, 3
        %vm1543 = vcmp.lt.s32.totalorder %v1542, 2
        %vm1544 = vcmp.eq.s32.totalorder %v1542, 0
        %v1545 = vxor.u32 %v1539, 2147483648
        %v1546 = vsel %vm1544, %v1538, %v1545
        %vm1547 = vcmp.eq.s32.totalorder %v1542, 2
        %v1548 = vxor.u32 %v1538, 2147483648
        %v1549 = vsel %vm1547, %v1548, %v1539
        %v1550 = vsel %vm1543, %v1546, %v1549
        %v1551 = vsel %vm1540, nan, %v1550
        %v1552 = vand.u32 2147483647, %v1435
        %vm1553 = vcmp.le.f32.partialorder %v1552, 0.7853982
        %vm1554 = vcmp.lt.s32.totalorder %v1435, 0
        %v1555 = vand.u32 %v1435, 2139095040
        %v1556 = vshrl.u32 %v1555, 23
        %v1557 = vsub.s32 %v1556, 127
        %v1558 = vand.u32 2147483647, %v1435
        %v1559 = vand.u32 %v1558, 8388607
        %v1560 = vor.u32 %v1559, 8388608
        %v1561 = vsub.s32 0, %v1560
        %v1562 = vadd.s32 %v1557, 1
        %vm1563 = vcmp.gt.s32.totalorder %v1562, 0
        %v1564 = vsel %vm1563, %v1562, 0
        %v1565 = vshrl.u32 %v1564, 5
        %v1566 = vand.u32 %v1564, 31
        %v1567 = vsub.s32 32, %v1566
        %v1568 = vshrl.u32 683565275, %v1567
        %v1569 = vshll.u32 683565275, %v1566
        %v1570 = vshrl.u32 2475754826, %v1567
        %v1571 = vor.u32 %v1569, %v1570
        %v1572 = vshll.u32 2475754826, %v1566
        %v1573 = vshrl.u32 2131351028, %v1567
        %v1574 = vor.u32 %v1572, %v1573
        %v1575 = vshll.u32 2131351028, %v1566
        %v1576 = vshrl.u32 2102212464, %v1567
        %v1577 = vor.u32 %v1575, %v1576
        %v1578 = vshll.u32 2102212464, %v1566
        %v1579 = vshrl.u32 920167782, %v1567
        %v1580 = vor.u32 %v1578, %v1579
        %v1581 = vshll.u32 920167782, %v1566
        %v1582 = vshrl.u32 1326507024, %v1567
        %v1583 = vor.u32 %v1581, %v1582
        %vm1584 = vcmp.lt.s32.totalorder %v1565, 1
        %vm1585 = vcmp.lt.s32.totalorder %v1565, 2
        %vm1586 = vcmp.lt.s32.totalorder %v1565, 3
        %vm1587 = vcmp.lt.s32.totalorder %v1565, 4
        %v1588 = vsel %vm1584, %v1568, %v1571
        %v1589 = vsel %vm1587, %v1577, 2102212464
        %v1590 = vsel %vm1586, %v1574, %v1589
        %v1591 = vsel %vm1585, %v1588, %v1590
        %v1592 = vsel %vm1584, %v1571, %v1574
        %v1593 = vsel %vm1587, %v1580, 920167782
        %v1594 = vsel %vm1586, %v1577, %v1593
        %v1595 = vsel %vm1585, %v1592, %v1594
        %v1596 = vsel %vm1584, %v1574, %v1577
        %v1597 = vsel %vm1587, %v1583, 1326507024
        %v1598 = vsel %vm1586, %v1580, %v1597
        %v1599 = vsel %vm1585, %v1596, %v1598
        %v1600 = vshll.u32 %v1560, 8
        %v1601 = vmul.u32.u64.compose %v1600, %v1599
        %v1602 = vextract.low.u32 %v1601
        %v1603 = vextract.high.u32 %v1601
        %v1604 = vmul.u32.u64.compose %v1600, %v1595
        %v1605 = vextract.low.u32 %v1604
        %v1606 = vextract.high.u32 %v1604
        %v1607 = vmul.u32 %v1600, %v1591
        %v1608 = vadd.s32 %v1603, %v1605
        %vm1609 = vc.u32 %v1603, %v1605
        %v1610 = vadd.s32 %v1606, 1
        %v1611 = vsel %vm1609, %v1610, %v1606
        %v1612 = vadd.s32 %v1607, %v1611
        %v1613 = vadd.s32 %v1612, 536870912
        %v1614 = vshrl.u32 %v1613, 30
        %v1615 = vshll.u32 %v1614, 30
        %v1616 = vsub.s32 %v1612, %v1615
        %vm1617 = vcmp.lt.s32.totalorder %v1616, 0
        %v1618 = vsub.s32 0, %v1616
        %v1619 = vsel %vm1617, %v1618, %v1616
        %v1620 = vclz %v1619
        %v1621 = vsub.s32 %v1620, 2
        %vm1622 = vcmp.gt.s32.totalorder 0, %v1621
        %v1623 = vsel %vm1622, 0, %v1621
        %v1624 = vsub.s32 32, %v1623
        %v1625 = vshll.u32 %v1616, %v1623
        %v1626 = vshrl.u32 %v1608, %v1624
        %v1627 = vor.u32 %v1625, %v1626
        %v1628 = vsub.s32 4294967266, %v1623
        %v1629 = vadd.s32 %v1628, 127
        %v1630 = vshll.u32 %v1629, 23
        %v1631 = vor.u32 4788187, %v1630
        %v1632 = vand.u32 2147483647, %v1631
        %v1634 = vcvt.s32.f32 %v1627
        %v1635 = vmul.f32 %v1634, %v1632
        %v1636 = vxor.u32 %v1635, 2147483648
        %v1637 = vsel %vm1554, %v1636, %v1635
        %v1638 = vsub.s32 4, %v1614
        %v1639 = vsel %vm1554, %v1638, %v1614
        %v1640 = vsel %vm1553, %v1435, %v1637
        %v1641 = vsel %vm1553, 0, %v1639
        %v1642 = vcosq.f32.pop %v1640
        %v1643 = vsinq.f32.pop %v1640
        %vm1644 = vweird.f32 %v1435
        %v1645 = vadd.s32 %v1641, 3
        %v1646 = vand.u32 %v1645, 3
        %vm1647 = vcmp.lt.s32.totalorder %v1646, 2
        %vm1648 = vcmp.eq.s32.totalorder %v1646, 0
        %v1649 = vxor.u32 %v1643, 2147483648
        %v1650 = vsel %vm1648, %v1642, %v1649
        %vm1651 = vcmp.eq.s32.totalorder %v1646, 2
        %v1652 = vxor.u32 %v1642, 2147483648
        %v1653 = vsel %vm1651, %v1652, %v1643
        %v1654 = vsel %vm1647, %v1650, %v1653
        %v1655 = vsel %vm1644, nan, %v1654
        %v1656 = vand.u32 2147483647, %v1440
        %vm1657 = vcmp.le.f32.partialorder %v1656, 0.7853982
        %vm1658 = vcmp.lt.s32.totalorder %v1440, 0
        %v1659 = vand.u32 %v1440, 2139095040
        %v1660 = vshrl.u32 %v1659, 23
        %v1661 = vsub.s32 %v1660, 127
        %v1662 = vand.u32 2147483647, %v1440
        %v1663 = vand.u32 %v1662, 8388607
        %v1664 = vor.u32 %v1663, 8388608
        %v1665 = vsub.s32 0, %v1664
        %v1666 = vadd.s32 %v1661, 1
        %vm1667 = vcmp.gt.s32.totalorder %v1666, 0
        %v1668 = vsel %vm1667, %v1666, 0
        %v1669 = vshrl.u32 %v1668, 5
        %v1670 = vand.u32 %v1668, 31
        %v1671 = vsub.s32 32, %v1670
        %v1672 = vshrl.u32 683565275, %v1671
        %v1673 = vshll.u32 683565275, %v1670
        %v1674 = vshrl.u32 2475754826, %v1671
        %v1675 = vor.u32 %v1673, %v1674
        %v1676 = vshll.u32 2475754826, %v1670
        %v1677 = vshrl.u32 2131351028, %v1671
        %v1678 = vor.u32 %v1676, %v1677
        %v1679 = vshll.u32 2131351028, %v1670
        %v1680 = vshrl.u32 2102212464, %v1671
        %v1681 = vor.u32 %v1679, %v1680
        %v1682 = vshll.u32 2102212464, %v1670
        %v1683 = vshrl.u32 920167782, %v1671
        %v1684 = vor.u32 %v1682, %v1683
        %v1685 = vshll.u32 920167782, %v1670
        %v1686 = vshrl.u32 1326507024, %v1671
        %v1687 = vor.u32 %v1685, %v1686
        %vm1688 = vcmp.lt.s32.totalorder %v1669, 1
        %vm1689 = vcmp.lt.s32.totalorder %v1669, 2
        %vm1690 = vcmp.lt.s32.totalorder %v1669, 3
        %vm1691 = vcmp.lt.s32.totalorder %v1669, 4
        %v1692 = vsel %vm1688, %v1672, %v1675
        %v1693 = vsel %vm1691, %v1681, 2102212464
        %v1694 = vsel %vm1690, %v1678, %v1693
        %v1695 = vsel %vm1689, %v1692, %v1694
        %v1696 = vsel %vm1688, %v1675, %v1678
        %v1697 = vsel %vm1691, %v1684, 920167782
        %v1698 = vsel %vm1690, %v1681, %v1697
        %v1699 = vsel %vm1689, %v1696, %v1698
        %v1700 = vsel %vm1688, %v1678, %v1681
        %v1701 = vsel %vm1691, %v1687, 1326507024
        %v1702 = vsel %vm1690, %v1684, %v1701
        %v1703 = vsel %vm1689, %v1700, %v1702
        %v1704 = vshll.u32 %v1664, 8
        %v1705 = vmul.u32.u64.compose %v1704, %v1703
        %v1706 = vextract.low.u32 %v1705
        %v1707 = vextract.high.u32 %v1705
        %v1708 = vmul.u32.u64.compose %v1704, %v1699
        %v1709 = vextract.low.u32 %v1708
        %v1710 = vextract.high.u32 %v1708
        %v1711 = vmul.u32 %v1704, %v1695
        %v1712 = vadd.s32 %v1707, %v1709
        %vm1713 = vc.u32 %v1707, %v1709
        %v1714 = vadd.s32 %v1710, 1
        %v1715 = vsel %vm1713, %v1714, %v1710
        %v1716 = vadd.s32 %v1711, %v1715
        %v1717 = vadd.s32 %v1716, 536870912
        %v1718 = vshrl.u32 %v1717, 30
        %v1719 = vshll.u32 %v1718, 30
        %v1720 = vsub.s32 %v1716, %v1719
        %vm1721 = vcmp.lt.s32.totalorder %v1720, 0
        %v1722 = vsub.s32 0, %v1720
        %v1723 = vsel %vm1721, %v1722, %v1720
        %v1724 = vclz %v1723
        %v1725 = vsub.s32 %v1724, 2
        %vm1726 = vcmp.gt.s32.totalorder 0, %v1725
        %v1727 = vsel %vm1726, 0, %v1725
        %v1728 = vsub.s32 32, %v1727
        %v1729 = vshll.u32 %v1720, %v1727
        %v1730 = vshrl.u32 %v1712, %v1728
        %v1731 = vor.u32 %v1729, %v1730
        %v1732 = vsub.s32 4294967266, %v1727
        %v1733 = vadd.s32 %v1732, 127
        %v1734 = vshll.u32 %v1733, 23
        %v1735 = vor.u32 4788187, %v1734
        %v1736 = vand.u32 2147483647, %v1735
        %v1738 = vcvt.s32.f32 %v1731
        %v1739 = vmul.f32 %v1738, %v1736
        %v1740 = vxor.u32 %v1739, 2147483648
        %v1741 = vsel %vm1658, %v1740, %v1739
        %v1742 = vsub.s32 4, %v1718
        %v1743 = vsel %vm1658, %v1742, %v1718
        %v1744 = vsel %vm1657, %v1440, %v1741
        %v1745 = vsel %vm1657, 0, %v1743
        %v1746 = vcosq.f32.pop %v1744
        %v1747 = vsinq.f32.pop %v1744
        %vm1748 = vweird.f32 %v1440
        %v1749 = vadd.s32 %v1745, 3
        %v1750 = vand.u32 %v1749, 3
        %vm1751 = vcmp.lt.s32.totalorder %v1750, 2
        %vm1752 = vcmp.eq.s32.totalorder %v1750, 0
        %v1753 = vxor.u32 %v1747, 2147483648
        %v1754 = vsel %vm1752, %v1746, %v1753
        %vm1755 = vcmp.eq.s32.totalorder %v1750, 2
        %v1756 = vxor.u32 %v1746, 2147483648
        %v1757 = vsel %vm1755, %v1756, %v1747
        %v1758 = vsel %vm1751, %v1754, %v1757
        %v1759 = vsel %vm1748, nan, %v1758
        %v1760 = vand.u32 2147483647, %v1445
        %vm1761 = vcmp.le.f32.partialorder %v1760, 0.7853982
        %vm1762 = vcmp.lt.s32.totalorder %v1445, 0
        %v1763 = vand.u32 %v1445, 2139095040
        %v1764 = vshrl.u32 %v1763, 23
        %v1765 = vsub.s32 %v1764, 127
        %v1766 = vand.u32 2147483647, %v1445
        %v1767 = vand.u32 %v1766, 8388607
        %v1768 = vor.u32 %v1767, 8388608
        %v1769 = vsub.s32 0, %v1768
        %v1770 = vadd.s32 %v1765, 1
        %vm1771 = vcmp.gt.s32.totalorder %v1770, 0
        %v1772 = vsel %vm1771, %v1770, 0
        %v1773 = vshrl.u32 %v1772, 5
        %v1774 = vand.u32 %v1772, 31
        %v1775 = vsub.s32 32, %v1774
        %v1776 = vshrl.u32 683565275, %v1775
        %v1777 = vshll.u32 683565275, %v1774
        %v1778 = vshrl.u32 2475754826, %v1775
        %v1779 = vor.u32 %v1777, %v1778
        %v1780 = vshll.u32 2475754826, %v1774
        %v1781 = vshrl.u32 2131351028, %v1775
        %v1782 = vor.u32 %v1780, %v1781
        %v1783 = vshll.u32 2131351028, %v1774
        %v1784 = vshrl.u32 2102212464, %v1775
        %v1785 = vor.u32 %v1783, %v1784
        %v1786 = vshll.u32 2102212464, %v1774
        %v1787 = vshrl.u32 920167782, %v1775
        %v1788 = vor.u32 %v1786, %v1787
        %v1789 = vshll.u32 920167782, %v1774
        %v1790 = vshrl.u32 1326507024, %v1775
        %v1791 = vor.u32 %v1789, %v1790
        %vm1792 = vcmp.lt.s32.totalorder %v1773, 1
        %vm1793 = vcmp.lt.s32.totalorder %v1773, 2
        %vm1794 = vcmp.lt.s32.totalorder %v1773, 3
        %vm1795 = vcmp.lt.s32.totalorder %v1773, 4
        %v1796 = vsel %vm1792, %v1776, %v1779
        %v1797 = vsel %vm1795, %v1785, 2102212464
        %v1798 = vsel %vm1794, %v1782, %v1797
        %v1799 = vsel %vm1793, %v1796, %v1798
        %v1800 = vsel %vm1792, %v1779, %v1782
        %v1801 = vsel %vm1795, %v1788, 920167782
        %v1802 = vsel %vm1794, %v1785, %v1801
        %v1803 = vsel %vm1793, %v1800, %v1802
        %v1804 = vsel %vm1792, %v1782, %v1785
        %v1805 = vsel %vm1795, %v1791, 1326507024
        %v1806 = vsel %vm1794, %v1788, %v1805
        %v1807 = vsel %vm1793, %v1804, %v1806
        %v1808 = vshll.u32 %v1768, 8
        %v1809 = vmul.u32.u64.compose %v1808, %v1807
        %v1810 = vextract.low.u32 %v1809
        %v1811 = vextract.high.u32 %v1809
        %v1812 = vmul.u32.u64.compose %v1808, %v1803
        %v1813 = vextract.low.u32 %v1812
        %v1814 = vextract.high.u32 %v1812
        %v1815 = vmul.u32 %v1808, %v1799
        %v1816 = vadd.s32 %v1811, %v1813
        %vm1817 = vc.u32 %v1811, %v1813
        %v1818 = vadd.s32 %v1814, 1
        %v1819 = vsel %vm1817, %v1818, %v1814
        %v1820 = vadd.s32 %v1815, %v1819
        %v1821 = vadd.s32 %v1820, 536870912
        %v1822 = vshrl.u32 %v1821, 30
        %v1823 = vshll.u32 %v1822, 30
        %v1824 = vsub.s32 %v1820, %v1823
        %vm1825 = vcmp.lt.s32.totalorder %v1824, 0
        %v1826 = vsub.s32 0, %v1824
        %v1827 = vsel %vm1825, %v1826, %v1824
        %v1828 = vclz %v1827
        %v1829 = vsub.s32 %v1828, 2
        %vm1830 = vcmp.gt.s32.totalorder 0, %v1829
        %v1831 = vsel %vm1830, 0, %v1829
        %v1832 = vsub.s32 32, %v1831
        %v1833 = vshll.u32 %v1824, %v1831
        %v1834 = vshrl.u32 %v1816, %v1832
        %v1835 = vor.u32 %v1833, %v1834
        %v1836 = vsub.s32 4294967266, %v1831
        %v1837 = vadd.s32 %v1836, 127
        %v1838 = vshll.u32 %v1837, 23
        %v1839 = vor.u32 4788187, %v1838
        %v1840 = vand.u32 2147483647, %v1839
        %v1842 = vcvt.s32.f32 %v1835
        %v1843 = vmul.f32 %v1842, %v1840
        %v1844 = vxor.u32 %v1843, 2147483648
        %v1845 = vsel %vm1762, %v1844, %v1843
        %v1846 = vsub.s32 4, %v1822
        %v1847 = vsel %vm1762, %v1846, %v1822
        %v1848 = vsel %vm1761, %v1445, %v1845
        %v1849 = vsel %vm1761, 0, %v1847
        %v1850 = vcosq.f32.pop %v1848
        %v1851 = vsinq.f32.pop %v1848
        %vm1852 = vweird.f32 %v1445
        %v1853 = vadd.s32 %v1849, 3
        %v1854 = vand.u32 %v1853, 3
        %vm1855 = vcmp.lt.s32.totalorder %v1854, 2
        %vm1856 = vcmp.eq.s32.totalorder %v1854, 0
        %v1857 = vxor.u32 %v1851, 2147483648
        %v1858 = vsel %vm1856, %v1850, %v1857
        %vm1859 = vcmp.eq.s32.totalorder %v1854, 2
        %v1860 = vxor.u32 %v1850, 2147483648
        %v1861 = vsel %vm1859, %v1860, %v1851
        %v1862 = vsel %vm1855, %v1858, %v1861
        %v1863 = vsel %vm1852, nan, %v1862
        %s1864 = scalar_lea.vmem %s3, 64
        %v1865 = vld [vmem:[%s1864] sm:$0xff]
        %v1866 = vld [vmem:[%s1864 + $0x8] sm:$0xff]
        %v1867 = vld [vmem:[%s1864 + $0x10] sm:$0xff]
        %v1868 = vld [vmem:[%s1864 + $0x18] sm:$0xff]
        %s1869 = scalar_lea.vmem %s4, 64
        %v1870 = vld [vmem:[%s1869] sm:$0xff]
        %v1871 = vld [vmem:[%s1869 + $0x8] sm:$0xff]
        %v1872 = vld [vmem:[%s1869 + $0x10] sm:$0xff]
        %v1873 = vld [vmem:[%s1869 + $0x18] sm:$0xff]
        %1875 = vset.pattern.permute.xlu0 0
        %1876 = vperm.xlu0 %1875, %v1870
        %v1877 = vpop.permute.xlu0 %1876
        %1880 = vset.pattern.permute.xlu0 0
        %1881 = vperm.xlu0 %1880, %v1871
        %v1882 = vpop.permute.xlu0 %1881
        %1885 = vset.pattern.permute.xlu0 0
        %1886 = vperm.xlu0 %1885, %v1872
        %v1887 = vpop.permute.xlu0 %1886
        %1890 = vset.pattern.permute.xlu0 0
        %1891 = vperm.xlu0 %1890, %v1873
        %v1892 = vpop.permute.xlu0 %1891
        %v1895 = vsel %vm807, %v1865, 0
        %v1898 = vsel %vm807, %v1866, 0
        %v1901 = vsel %vm807, %v1867, 0
        %v1904 = vsel %vm807, %v1868, 0
        %1906 = vmatprep.subr.mxu0 0.0
        %1907 = vmatpush1.msra.mxu0 %v1551
        %1908 = vmatprep.subr.mxu0 0.0
        %1909 = vmatpush1.msra.mxu0 %v1655
        %1910 = vmatprep.subr.mxu0 0.0
        %1911 = vmatpush1.msra.mxu0 %v1759
        %1912 = vmatprep.subr.mxu0 0.0
        %1913 = vmatpush1.msra.mxu0 %v1863
        %1914 = vmatprep.subr.mxu0 0.0
        %1915 = vmatpush1.msra.mxu0 0.0
        %1916 = vmatprep.subr.mxu0 0.0
        %1917 = vmatpush1.msra.mxu0 0.0
        %1918 = vmatprep.subr.mxu0 0.0
        %1919 = vmatpush1.msra.mxu0 0.0
        %1920 = vmatprep.subr.mxu0 0.0
        %1921 = vmatpush1.msra.mxu0 0.0
        %1922 = vmatprep.subr.mxu0 0.0
        %1923 = vmatpush1.msra.mxu0 0.0
        %1924 = vmatprep.subr.mxu0 0.0
        %1925 = vmatpush1.msra.mxu0 0.0
        %1926 = vmatprep.subr.mxu0 0.0
        %1927 = vmatpush1.msra.mxu0 0.0
        %1928 = vmatprep.subr.mxu0 0.0
        %1929 = vmatpush1.msra.mxu0 0.0
        %1930 = vmatprep.subr.mxu0 0.0
        %1931 = vmatpush1.msra.mxu0 0.0
        %1932 = vmatprep.subr.mxu0 0.0
        %1933 = vmatpush1.msra.mxu0 0.0
        %1934 = vmatprep.subr.mxu0 0.0
        %1935 = vmatpush1.msra.mxu0 0.0
        %1936 = vmatprep.subr.mxu0 0.0
        %1937 = vmatpush1.msra.mxu0 0.0
        %1938 = vmatprep.subr.mxu0 0.0
        %1939 = vmatpush1.msra.mxu0 0.0
        %1940 = vmatprep.subr.mxu0 0.0
        %1941 = vmatpush1.msra.mxu0 0.0
        %1942 = vmatprep.subr.mxu0 0.0
        %1943 = vmatpush1.msra.mxu0 0.0
        %1944 = vmatprep.subr.mxu0 0.0
        %1945 = vmatpush1.msra.mxu0 0.0
        %1946 = vmatprep.subr.mxu0 0.0
        %1947 = vmatpush1.msra.mxu0 0.0
        %1948 = vmatprep.subr.mxu0 0.0
        %1949 = vmatpush1.msra.mxu0 0.0
        %1950 = vmatprep.subr.mxu0 0.0
        %1951 = vmatpush1.msra.mxu0 0.0
        %1952 = vmatprep.subr.mxu0 0.0
        %1953 = vmatpush1.msra.mxu0 0.0
        %1954 = vmatprep.subr.mxu0 0.0
        %1955 = vmatpush1.msra.mxu0 0.0
        %1956 = vmatprep.subr.mxu0 0.0
        %1957 = vmatpush1.msra.mxu0 0.0
        %1958 = vmatprep.subr.mxu0 0.0
        %1959 = vmatpush1.msra.mxu0 0.0
        %1960 = vmatprep.subr.mxu0 0.0
        %1961 = vmatpush1.msra.mxu0 0.0
        %1962 = vmatprep.subr.mxu0 0.0
        %1963 = vmatpush1.msra.mxu0 0.0
        %1964 = vmatprep.subr.mxu0 0.0
        %1965 = vmatpush1.msra.mxu0 0.0
        %1966 = vmatprep.subr.mxu0 0.0
        %1967 = vmatpush1.msra.mxu0 0.0
        %1968 = vmatprep.subr.mxu0 0.0
        %1969 = vmatpush1.msra.mxu0 0.0
        %1970 = vmatprep.mubr.f32.mxu0 0.0
        %1971 = vmatmul.mubr.f32.gmra.mrb[0].mxu0 %v1895
        %v1972 = vpop.f32.mrb[0].mxu0
        %v1973 = vadd.f32 %v1877, %v1972
        %v1974 = vpop.f32.mrb[0].mxu0
        %1975 = vmatprep.mubr.f32.mxu0 0.0
        %1976 = vmatmul.mubr.f32.gmra.mrb[0].mxu0 %v1898
        %v1977 = vpop.f32.mrb[0].mxu0
        %v1978 = vadd.f32 %v1882, %v1977
        %v1979 = vpop.f32.mrb[0].mxu0
        %1980 = vmatprep.mubr.f32.mxu0 0.0
        %1981 = vmatmul.mubr.f32.gmra.mrb[0].mxu0 %v1901
        %v1982 = vpop.f32.mrb[0].mxu0
        %v1983 = vadd.f32 %v1887, %v1982
        %v1984 = vpop.f32.mrb[0].mxu0
        %1985 = vmatprep.mubr.f32.mxu0 0.0
        %1986 = vmatmul.mubr.f32.gmra.mrb[0].mxu0 %v1904
        %v1987 = vpop.f32.mrb[0].mxu0
        %v1988 = vadd.f32 %v1892, %v1987
        %v1989 = vpop.f32.mrb[0].mxu0
        %1990 = vdwg.mxu0
        %v1991 = vand.u32 2147483647, %v1973
        %vm1992 = vcmp.le.f32.partialorder %v1991, 0.7853982
        %vm1993 = vcmp.lt.s32.totalorder %v1973, 0
        %v1994 = vand.u32 %v1973, 2139095040
        %v1995 = vshrl.u32 %v1994, 23
        %v1996 = vsub.s32 %v1995, 127
        %v1997 = vand.u32 2147483647, %v1973
        %v1998 = vand.u32 %v1997, 8388607
        %v1999 = vor.u32 %v1998, 8388608
        %v2000 = vsub.s32 0, %v1999
        %v2001 = vadd.s32 %v1996, 1
        %vm2002 = vcmp.gt.s32.totalorder %v2001, 0
        %v2003 = vsel %vm2002, %v2001, 0
        %v2004 = vshrl.u32 %v2003, 5
        %v2005 = vand.u32 %v2003, 31
        %v2006 = vsub.s32 32, %v2005
        %v2007 = vshrl.u32 683565275, %v2006
        %v2008 = vshll.u32 683565275, %v2005
        %v2009 = vshrl.u32 2475754826, %v2006
        %v2010 = vor.u32 %v2008, %v2009
        %v2011 = vshll.u32 2475754826, %v2005
        %v2012 = vshrl.u32 2131351028, %v2006
        %v2013 = vor.u32 %v2011, %v2012
        %v2014 = vshll.u32 2131351028, %v2005
        %v2015 = vshrl.u32 2102212464, %v2006
        %v2016 = vor.u32 %v2014, %v2015
        %v2017 = vshll.u32 2102212464, %v2005
        %v2018 = vshrl.u32 920167782, %v2006
        %v2019 = vor.u32 %v2017, %v2018
        %v2020 = vshll.u32 920167782, %v2005
        %v2021 = vshrl.u32 1326507024, %v2006
        %v2022 = vor.u32 %v2020, %v2021
        %vm2023 = vcmp.lt.s32.totalorder %v2004, 1
        %vm2024 = vcmp.lt.s32.totalorder %v2004, 2
        %vm2025 = vcmp.lt.s32.totalorder %v2004, 3
        %vm2026 = vcmp.lt.s32.totalorder %v2004, 4
        %v2027 = vsel %vm2023, %v2007, %v2010
        %v2028 = vsel %vm2026, %v2016, 2102212464
        %v2029 = vsel %vm2025, %v2013, %v2028
        %v2030 = vsel %vm2024, %v2027, %v2029
        %v2031 = vsel %vm2023, %v2010, %v2013
        %v2032 = vsel %vm2026, %v2019, 920167782
        %v2033 = vsel %vm2025, %v2016, %v2032
        %v2034 = vsel %vm2024, %v2031, %v2033
        %v2035 = vsel %vm2023, %v2013, %v2016
        %v2036 = vsel %vm2026, %v2022, 1326507024
        %v2037 = vsel %vm2025, %v2019, %v2036
        %v2038 = vsel %vm2024, %v2035, %v2037
        %v2039 = vshll.u32 %v1999, 8
        %v2040 = vmul.u32.u64.compose %v2039, %v2038
        %v2041 = vextract.low.u32 %v2040
        %v2042 = vextract.high.u32 %v2040
        %v2043 = vmul.u32.u64.compose %v2039, %v2034
        %v2044 = vextract.low.u32 %v2043
        %v2045 = vextract.high.u32 %v2043
        %v2046 = vmul.u32 %v2039, %v2030
        %v2047 = vadd.s32 %v2042, %v2044
        %vm2048 = vc.u32 %v2042, %v2044
        %v2049 = vadd.s32 %v2045, 1
        %v2050 = vsel %vm2048, %v2049, %v2045
        %v2051 = vadd.s32 %v2046, %v2050
        %v2052 = vadd.s32 %v2051, 536870912
        %v2053 = vshrl.u32 %v2052, 30
        %v2054 = vshll.u32 %v2053, 30
        %v2055 = vsub.s32 %v2051, %v2054
        %vm2056 = vcmp.lt.s32.totalorder %v2055, 0
        %v2057 = vsub.s32 0, %v2055
        %v2058 = vsel %vm2056, %v2057, %v2055
        %v2059 = vclz %v2058
        %v2060 = vsub.s32 %v2059, 2
        %vm2061 = vcmp.gt.s32.totalorder 0, %v2060
        %v2062 = vsel %vm2061, 0, %v2060
        %v2063 = vsub.s32 32, %v2062
        %v2064 = vshll.u32 %v2055, %v2062
        %v2065 = vshrl.u32 %v2047, %v2063
        %v2066 = vor.u32 %v2064, %v2065
        %v2067 = vsub.s32 4294967266, %v2062
        %v2068 = vadd.s32 %v2067, 127
        %v2069 = vshll.u32 %v2068, 23
        %v2070 = vor.u32 4788187, %v2069
        %v2071 = vand.u32 2147483647, %v2070
        %v2073 = vcvt.s32.f32 %v2066
        %v2074 = vmul.f32 %v2073, %v2071
        %v2075 = vxor.u32 %v2074, 2147483648
        %v2076 = vsel %vm1993, %v2075, %v2074
        %v2077 = vsub.s32 4, %v2053
        %v2078 = vsel %vm1993, %v2077, %v2053
        %v2079 = vsel %vm1992, %v1973, %v2076
        %v2080 = vsel %vm1992, 0, %v2078
        %v2081 = vcosq.f32.pop %v2079
        %v2082 = vsinq.f32.pop %v2079
        %vm2083 = vweird.f32 %v1973
        %v2084 = vadd.s32 %v2080, 3
        %v2085 = vand.u32 %v2084, 3
        %vm2086 = vcmp.lt.s32.totalorder %v2085, 2
        %vm2087 = vcmp.eq.s32.totalorder %v2085, 0
        %v2088 = vxor.u32 %v2082, 2147483648
        %v2089 = vsel %vm2087, %v2081, %v2088
        %vm2090 = vcmp.eq.s32.totalorder %v2085, 2
        %v2091 = vxor.u32 %v2081, 2147483648
        %v2092 = vsel %vm2090, %v2091, %v2082
        %v2093 = vsel %vm2086, %v2089, %v2092
        %v2094 = vsel %vm2083, nan, %v2093
        %v2095 = vand.u32 2147483647, %v1978
        %vm2096 = vcmp.le.f32.partialorder %v2095, 0.7853982
        %vm2097 = vcmp.lt.s32.totalorder %v1978, 0
        %v2098 = vand.u32 %v1978, 2139095040
        %v2099 = vshrl.u32 %v2098, 23
        %v2100 = vsub.s32 %v2099, 127
        %v2101 = vand.u32 2147483647, %v1978
        %v2102 = vand.u32 %v2101, 8388607
        %v2103 = vor.u32 %v2102, 8388608
        %v2104 = vsub.s32 0, %v2103
        %v2105 = vadd.s32 %v2100, 1
        %vm2106 = vcmp.gt.s32.totalorder %v2105, 0
        %v2107 = vsel %vm2106, %v2105, 0
        %v2108 = vshrl.u32 %v2107, 5
        %v2109 = vand.u32 %v2107, 31
        %v2110 = vsub.s32 32, %v2109
        %v2111 = vshrl.u32 683565275, %v2110
        %v2112 = vshll.u32 683565275, %v2109
        %v2113 = vshrl.u32 2475754826, %v2110
        %v2114 = vor.u32 %v2112, %v2113
        %v2115 = vshll.u32 2475754826, %v2109
        %v2116 = vshrl.u32 2131351028, %v2110
        %v2117 = vor.u32 %v2115, %v2116
        %v2118 = vshll.u32 2131351028, %v2109
        %v2119 = vshrl.u32 2102212464, %v2110
        %v2120 = vor.u32 %v2118, %v2119
        %v2121 = vshll.u32 2102212464, %v2109
        %v2122 = vshrl.u32 920167782, %v2110
        %v2123 = vor.u32 %v2121, %v2122
        %v2124 = vshll.u32 920167782, %v2109
        %v2125 = vshrl.u32 1326507024, %v2110
        %v2126 = vor.u32 %v2124, %v2125
        %vm2127 = vcmp.lt.s32.totalorder %v2108, 1
        %vm2128 = vcmp.lt.s32.totalorder %v2108, 2
        %vm2129 = vcmp.lt.s32.totalorder %v2108, 3
        %vm2130 = vcmp.lt.s32.totalorder %v2108, 4
        %v2131 = vsel %vm2127, %v2111, %v2114
        %v2132 = vsel %vm2130, %v2120, 2102212464
        %v2133 = vsel %vm2129, %v2117, %v2132
        %v2134 = vsel %vm2128, %v2131, %v2133
        %v2135 = vsel %vm2127, %v2114, %v2117
        %v2136 = vsel %vm2130, %v2123, 920167782
        %v2137 = vsel %vm2129, %v2120, %v2136
        %v2138 = vsel %vm2128, %v2135, %v2137
        %v2139 = vsel %vm2127, %v2117, %v2120
        %v2140 = vsel %vm2130, %v2126, 1326507024
        %v2141 = vsel %vm2129, %v2123, %v2140
        %v2142 = vsel %vm2128, %v2139, %v2141
        %v2143 = vshll.u32 %v2103, 8
        %v2144 = vmul.u32.u64.compose %v2143, %v2142
        %v2145 = vextract.low.u32 %v2144
        %v2146 = vextract.high.u32 %v2144
        %v2147 = vmul.u32.u64.compose %v2143, %v2138
        %v2148 = vextract.low.u32 %v2147
        %v2149 = vextract.high.u32 %v2147
        %v2150 = vmul.u32 %v2143, %v2134
        %v2151 = vadd.s32 %v2146, %v2148
        %vm2152 = vc.u32 %v2146, %v2148
        %v2153 = vadd.s32 %v2149, 1
        %v2154 = vsel %vm2152, %v2153, %v2149
        %v2155 = vadd.s32 %v2150, %v2154
        %v2156 = vadd.s32 %v2155, 536870912
        %v2157 = vshrl.u32 %v2156, 30
        %v2158 = vshll.u32 %v2157, 30
        %v2159 = vsub.s32 %v2155, %v2158
        %vm2160 = vcmp.lt.s32.totalorder %v2159, 0
        %v2161 = vsub.s32 0, %v2159
        %v2162 = vsel %vm2160, %v2161, %v2159
        %v2163 = vclz %v2162
        %v2164 = vsub.s32 %v2163, 2
        %vm2165 = vcmp.gt.s32.totalorder 0, %v2164
        %v2166 = vsel %vm2165, 0, %v2164
        %v2167 = vsub.s32 32, %v2166
        %v2168 = vshll.u32 %v2159, %v2166
        %v2169 = vshrl.u32 %v2151, %v2167
        %v2170 = vor.u32 %v2168, %v2169
        %v2171 = vsub.s32 4294967266, %v2166
        %v2172 = vadd.s32 %v2171, 127
        %v2173 = vshll.u32 %v2172, 23
        %v2174 = vor.u32 4788187, %v2173
        %v2175 = vand.u32 2147483647, %v2174
        %v2177 = vcvt.s32.f32 %v2170
        %v2178 = vmul.f32 %v2177, %v2175
        %v2179 = vxor.u32 %v2178, 2147483648
        %v2180 = vsel %vm2097, %v2179, %v2178
        %v2181 = vsub.s32 4, %v2157
        %v2182 = vsel %vm2097, %v2181, %v2157
        %v2183 = vsel %vm2096, %v1978, %v2180
        %v2184 = vsel %vm2096, 0, %v2182
        %v2185 = vcosq.f32.pop %v2183
        %v2186 = vsinq.f32.pop %v2183
        %vm2187 = vweird.f32 %v1978
        %v2188 = vadd.s32 %v2184, 3
        %v2189 = vand.u32 %v2188, 3
        %vm2190 = vcmp.lt.s32.totalorder %v2189, 2
        %vm2191 = vcmp.eq.s32.totalorder %v2189, 0
        %v2192 = vxor.u32 %v2186, 2147483648
        %v2193 = vsel %vm2191, %v2185, %v2192
        %vm2194 = vcmp.eq.s32.totalorder %v2189, 2
        %v2195 = vxor.u32 %v2185, 2147483648
        %v2196 = vsel %vm2194, %v2195, %v2186
        %v2197 = vsel %vm2190, %v2193, %v2196
        %v2198 = vsel %vm2187, nan, %v2197
        %v2199 = vand.u32 2147483647, %v1983
        %vm2200 = vcmp.le.f32.partialorder %v2199, 0.7853982
        %vm2201 = vcmp.lt.s32.totalorder %v1983, 0
        %v2202 = vand.u32 %v1983, 2139095040
        %v2203 = vshrl.u32 %v2202, 23
        %v2204 = vsub.s32 %v2203, 127
        %v2205 = vand.u32 2147483647, %v1983
        %v2206 = vand.u32 %v2205, 8388607
        %v2207 = vor.u32 %v2206, 8388608
        %v2208 = vsub.s32 0, %v2207
        %v2209 = vadd.s32 %v2204, 1
        %vm2210 = vcmp.gt.s32.totalorder %v2209, 0
        %v2211 = vsel %vm2210, %v2209, 0
        %v2212 = vshrl.u32 %v2211, 5
        %v2213 = vand.u32 %v2211, 31
        %v2214 = vsub.s32 32, %v2213
        %v2215 = vshrl.u32 683565275, %v2214
        %v2216 = vshll.u32 683565275, %v2213
        %v2217 = vshrl.u32 2475754826, %v2214
        %v2218 = vor.u32 %v2216, %v2217
        %v2219 = vshll.u32 2475754826, %v2213
        %v2220 = vshrl.u32 2131351028, %v2214
        %v2221 = vor.u32 %v2219, %v2220
        %v2222 = vshll.u32 2131351028, %v2213
        %v2223 = vshrl.u32 2102212464, %v2214
        %v2224 = vor.u32 %v2222, %v2223
        %v2225 = vshll.u32 2102212464, %v2213
        %v2226 = vshrl.u32 920167782, %v2214
        %v2227 = vor.u32 %v2225, %v2226
        %v2228 = vshll.u32 920167782, %v2213
        %v2229 = vshrl.u32 1326507024, %v2214
        %v2230 = vor.u32 %v2228, %v2229
        %vm2231 = vcmp.lt.s32.totalorder %v2212, 1
        %vm2232 = vcmp.lt.s32.totalorder %v2212, 2
        %vm2233 = vcmp.lt.s32.totalorder %v2212, 3
        %vm2234 = vcmp.lt.s32.totalorder %v2212, 4
        %v2235 = vsel %vm2231, %v2215, %v2218
        %v2236 = vsel %vm2234, %v2224, 2102212464
        %v2237 = vsel %vm2233, %v2221, %v2236
        %v2238 = vsel %vm2232, %v2235, %v2237
        %v2239 = vsel %vm2231, %v2218, %v2221
        %v2240 = vsel %vm2234, %v2227, 920167782
        %v2241 = vsel %vm2233, %v2224, %v2240
        %v2242 = vsel %vm2232, %v2239, %v2241
        %v2243 = vsel %vm2231, %v2221, %v2224
        %v2244 = vsel %vm2234, %v2230, 1326507024
        %v2245 = vsel %vm2233, %v2227, %v2244
        %v2246 = vsel %vm2232, %v2243, %v2245
        %v2247 = vshll.u32 %v2207, 8
        %v2248 = vmul.u32.u64.compose %v2247, %v2246
        %v2249 = vextract.low.u32 %v2248
        %v2250 = vextract.high.u32 %v2248
        %v2251 = vmul.u32.u64.compose %v2247, %v2242
        %v2252 = vextract.low.u32 %v2251
        %v2253 = vextract.high.u32 %v2251
        %v2254 = vmul.u32 %v2247, %v2238
        %v2255 = vadd.s32 %v2250, %v2252
        %vm2256 = vc.u32 %v2250, %v2252
        %v2257 = vadd.s32 %v2253, 1
        %v2258 = vsel %vm2256, %v2257, %v2253
        %v2259 = vadd.s32 %v2254, %v2258
        %v2260 = vadd.s32 %v2259, 536870912
        %v2261 = vshrl.u32 %v2260, 30
        %v2262 = vshll.u32 %v2261, 30
        %v2263 = vsub.s32 %v2259, %v2262
        %vm2264 = vcmp.lt.s32.totalorder %v2263, 0
        %v2265 = vsub.s32 0, %v2263
        %v2266 = vsel %vm2264, %v2265, %v2263
        %v2267 = vclz %v2266
        %v2268 = vsub.s32 %v2267, 2
        %vm2269 = vcmp.gt.s32.totalorder 0, %v2268
        %v2270 = vsel %vm2269, 0, %v2268
        %v2271 = vsub.s32 32, %v2270
        %v2272 = vshll.u32 %v2263, %v2270
        %v2273 = vshrl.u32 %v2255, %v2271
        %v2274 = vor.u32 %v2272, %v2273
        %v2275 = vsub.s32 4294967266, %v2270
        %v2276 = vadd.s32 %v2275, 127
        %v2277 = vshll.u32 %v2276, 23
        %v2278 = vor.u32 4788187, %v2277
        %v2279 = vand.u32 2147483647, %v2278
        %v2281 = vcvt.s32.f32 %v2274
        %v2282 = vmul.f32 %v2281, %v2279
        %v2283 = vxor.u32 %v2282, 2147483648
        %v2284 = vsel %vm2201, %v2283, %v2282
        %v2285 = vsub.s32 4, %v2261
        %v2286 = vsel %vm2201, %v2285, %v2261
        %v2287 = vsel %vm2200, %v1983, %v2284
        %v2288 = vsel %vm2200, 0, %v2286
        %v2289 = vcosq.f32.pop %v2287
        %v2290 = vsinq.f32.pop %v2287
        %vm2291 = vweird.f32 %v1983
        %v2292 = vadd.s32 %v2288, 3
        %v2293 = vand.u32 %v2292, 3
        %vm2294 = vcmp.lt.s32.totalorder %v2293, 2
        %vm2295 = vcmp.eq.s32.totalorder %v2293, 0
        %v2296 = vxor.u32 %v2290, 2147483648
        %v2297 = vsel %vm2295, %v2289, %v2296
        %vm2298 = vcmp.eq.s32.totalorder %v2293, 2
        %v2299 = vxor.u32 %v2289, 2147483648
        %v2300 = vsel %vm2298, %v2299, %v2290
        %v2301 = vsel %vm2294, %v2297, %v2300
        %v2302 = vsel %vm2291, nan, %v2301
        %v2303 = vand.u32 2147483647, %v1988
        %vm2304 = vcmp.le.f32.partialorder %v2303, 0.7853982
        %vm2305 = vcmp.lt.s32.totalorder %v1988, 0
        %v2306 = vand.u32 %v1988, 2139095040
        %v2307 = vshrl.u32 %v2306, 23
        %v2308 = vsub.s32 %v2307, 127
        %v2309 = vand.u32 2147483647, %v1988
        %v2310 = vand.u32 %v2309, 8388607
        %v2311 = vor.u32 %v2310, 8388608
        %v2312 = vsub.s32 0, %v2311
        %v2313 = vadd.s32 %v2308, 1
        %vm2314 = vcmp.gt.s32.totalorder %v2313, 0
        %v2315 = vsel %vm2314, %v2313, 0
        %v2316 = vshrl.u32 %v2315, 5
        %v2317 = vand.u32 %v2315, 31
        %v2318 = vsub.s32 32, %v2317
        %v2319 = vshrl.u32 683565275, %v2318
        %v2320 = vshll.u32 683565275, %v2317
        %v2321 = vshrl.u32 2475754826, %v2318
        %v2322 = vor.u32 %v2320, %v2321
        %v2323 = vshll.u32 2475754826, %v2317
        %v2324 = vshrl.u32 2131351028, %v2318
        %v2325 = vor.u32 %v2323, %v2324
        %v2326 = vshll.u32 2131351028, %v2317
        %v2327 = vshrl.u32 2102212464, %v2318
        %v2328 = vor.u32 %v2326, %v2327
        %v2329 = vshll.u32 2102212464, %v2317
        %v2330 = vshrl.u32 920167782, %v2318
        %v2331 = vor.u32 %v2329, %v2330
        %v2332 = vshll.u32 920167782, %v2317
        %v2333 = vshrl.u32 1326507024, %v2318
        %v2334 = vor.u32 %v2332, %v2333
        %vm2335 = vcmp.lt.s32.totalorder %v2316, 1
        %vm2336 = vcmp.lt.s32.totalorder %v2316, 2
        %vm2337 = vcmp.lt.s32.totalorder %v2316, 3
        %vm2338 = vcmp.lt.s32.totalorder %v2316, 4
        %v2339 = vsel %vm2335, %v2319, %v2322
        %v2340 = vsel %vm2338, %v2328, 2102212464
        %v2341 = vsel %vm2337, %v2325, %v2340
        %v2342 = vsel %vm2336, %v2339, %v2341
        %v2343 = vsel %vm2335, %v2322, %v2325
        %v2344 = vsel %vm2338, %v2331, 920167782
        %v2345 = vsel %vm2337, %v2328, %v2344
        %v2346 = vsel %vm2336, %v2343, %v2345
        %v2347 = vsel %vm2335, %v2325, %v2328
        %v2348 = vsel %vm2338, %v2334, 1326507024
        %v2349 = vsel %vm2337, %v2331, %v2348
        %v2350 = vsel %vm2336, %v2347, %v2349
        %v2351 = vshll.u32 %v2311, 8
        %v2352 = vmul.u32.u64.compose %v2351, %v2350
        %v2353 = vextract.low.u32 %v2352
        %v2354 = vextract.high.u32 %v2352
        %v2355 = vmul.u32.u64.compose %v2351, %v2346
        %v2356 = vextract.low.u32 %v2355
        %v2357 = vextract.high.u32 %v2355
        %v2358 = vmul.u32 %v2351, %v2342
        %v2359 = vadd.s32 %v2354, %v2356
        %vm2360 = vc.u32 %v2354, %v2356
        %v2361 = vadd.s32 %v2357, 1
        %v2362 = vsel %vm2360, %v2361, %v2357
        %v2363 = vadd.s32 %v2358, %v2362
        %v2364 = vadd.s32 %v2363, 536870912
        %v2365 = vshrl.u32 %v2364, 30
        %v2366 = vshll.u32 %v2365, 30
        %v2367 = vsub.s32 %v2363, %v2366
        %vm2368 = vcmp.lt.s32.totalorder %v2367, 0
        %v2369 = vsub.s32 0, %v2367
        %v2370 = vsel %vm2368, %v2369, %v2367
        %v2371 = vclz %v2370
        %v2372 = vsub.s32 %v2371, 2
        %vm2373 = vcmp.gt.s32.totalorder 0, %v2372
        %v2374 = vsel %vm2373, 0, %v2372
        %v2375 = vsub.s32 32, %v2374
        %v2376 = vshll.u32 %v2367, %v2374
        %v2377 = vshrl.u32 %v2359, %v2375
        %v2378 = vor.u32 %v2376, %v2377
        %v2379 = vsub.s32 4294967266, %v2374
        %v2380 = vadd.s32 %v2379, 127
        %v2381 = vshll.u32 %v2380, 23
        %v2382 = vor.u32 4788187, %v2381
        %v2383 = vand.u32 2147483647, %v2382
        %v2385 = vcvt.s32.f32 %v2378
        %v2386 = vmul.f32 %v2385, %v2383
        %v2387 = vxor.u32 %v2386, 2147483648
        %v2388 = vsel %vm2305, %v2387, %v2386
        %v2389 = vsub.s32 4, %v2365
        %v2390 = vsel %vm2305, %v2389, %v2365
        %v2391 = vsel %vm2304, %v1988, %v2388
        %v2392 = vsel %vm2304, 0, %v2390
        %v2393 = vcosq.f32.pop %v2391
        %v2394 = vsinq.f32.pop %v2391
        %vm2395 = vweird.f32 %v1988
        %v2396 = vadd.s32 %v2392, 3
        %v2397 = vand.u32 %v2396, 3
        %vm2398 = vcmp.lt.s32.totalorder %v2397, 2
        %vm2399 = vcmp.eq.s32.totalorder %v2397, 0
        %v2400 = vxor.u32 %v2394, 2147483648
        %v2401 = vsel %vm2399, %v2393, %v2400
        %vm2402 = vcmp.eq.s32.totalorder %v2397, 2
        %v2403 = vxor.u32 %v2393, 2147483648
        %v2404 = vsel %vm2402, %v2403, %v2394
        %v2405 = vsel %vm2398, %v2401, %v2404
        %v2406 = vsel %vm2395, nan, %v2405
        %v2407 = vld [vmem:[%s5] sm:$0x7]
        %v2408 = vld [vmem:[%s6] sm:$0x7]
        %2410 = vset.pattern.permute.xlu0 0
        %2411 = vperm.xlu0 %2410, %v2408
        %v2412 = vpop.permute.xlu0 %2411
        %v2415 = vsel %vm807, %v2407, 0
        %2417 = vmatprep.subr.mxu0 0.0
        %2418 = vmatpush1.msra.mxu0 %v2094
        %2419 = vmatprep.subr.mxu0 0.0
        %2420 = vmatpush1.msra.mxu0 %v2198
        %2421 = vmatprep.subr.mxu0 0.0
        %2422 = vmatpush1.msra.mxu0 %v2302
        %2423 = vmatprep.subr.mxu0 0.0
        %2424 = vmatpush1.msra.mxu0 %v2406
        %2425 = vmatprep.subr.mxu0 0.0
        %2426 = vmatpush1.msra.mxu0 0.0
        %2427 = vmatprep.subr.mxu0 0.0
        %2428 = vmatpush1.msra.mxu0 0.0
        %2429 = vmatprep.subr.mxu0 0.0
        %2430 = vmatpush1.msra.mxu0 0.0
        %2431 = vmatprep.subr.mxu0 0.0
        %2432 = vmatpush1.msra.mxu0 0.0
        %2433 = vmatprep.subr.mxu0 0.0
        %2434 = vmatpush1.msra.mxu0 0.0
        %2435 = vmatprep.subr.mxu0 0.0
        %2436 = vmatpush1.msra.mxu0 0.0
        %2437 = vmatprep.subr.mxu0 0.0
        %2438 = vmatpush1.msra.mxu0 0.0
        %2439 = vmatprep.subr.mxu0 0.0
        %2440 = vmatpush1.msra.mxu0 0.0
        %2441 = vmatprep.subr.mxu0 0.0
        %2442 = vmatpush1.msra.mxu0 0.0
        %2443 = vmatprep.subr.mxu0 0.0
        %2444 = vmatpush1.msra.mxu0 0.0
        %2445 = vmatprep.subr.mxu0 0.0
        %2446 = vmatpush1.msra.mxu0 0.0
        %2447 = vmatprep.subr.mxu0 0.0
        %2448 = vmatpush1.msra.mxu0 0.0
        %2449 = vmatprep.subr.mxu0 0.0
        %2450 = vmatpush1.msra.mxu0 0.0
        %2451 = vmatprep.subr.mxu0 0.0
        %2452 = vmatpush1.msra.mxu0 0.0
        %2453 = vmatprep.subr.mxu0 0.0
        %2454 = vmatpush1.msra.mxu0 0.0
        %2455 = vmatprep.subr.mxu0 0.0
        %2456 = vmatpush1.msra.mxu0 0.0
        %2457 = vmatprep.subr.mxu0 0.0
        %2458 = vmatpush1.msra.mxu0 0.0
        %2459 = vmatprep.subr.mxu0 0.0
        %2460 = vmatpush1.msra.mxu0 0.0
        %2461 = vmatprep.subr.mxu0 0.0
        %2462 = vmatpush1.msra.mxu0 0.0
        %2463 = vmatprep.subr.mxu0 0.0
        %2464 = vmatpush1.msra.mxu0 0.0
        %2465 = vmatprep.subr.mxu0 0.0
        %2466 = vmatpush1.msra.mxu0 0.0
        %2467 = vmatprep.subr.mxu0 0.0
        %2468 = vmatpush1.msra.mxu0 0.0
        %2469 = vmatprep.subr.mxu0 0.0
        %2470 = vmatpush1.msra.mxu0 0.0
        %2471 = vmatprep.subr.mxu0 0.0
        %2472 = vmatpush1.msra.mxu0 0.0
        %2473 = vmatprep.subr.mxu0 0.0
        %2474 = vmatpush1.msra.mxu0 0.0
        %2475 = vmatprep.subr.mxu0 0.0
        %2476 = vmatpush1.msra.mxu0 0.0
        %2477 = vmatprep.subr.mxu0 0.0
        %2478 = vmatpush1.msra.mxu0 0.0
        %2479 = vmatprep.subr.mxu0 0.0
        %2480 = vmatpush1.msra.mxu0 0.0
        %2481 = vmatprep.mubr.f32.mxu0 0.0
        %2482 = vmatmul.mubr.f32.gmra.mrb[0].mxu0 %v2415
        %v2483 = vpop.f32.mrb[0].mxu0
        %v2484 = vadd.f32 %v2412, %v2483
        %v2485 = vpop.f32.mrb[0].mxu0
        %2486 = vdwg.mxu0
        %v2487 = vand.u32 2147483647, %v2484
        %vm2488 = vcmp.le.f32.partialorder %v2487, 0.7853982
        %vm2489 = vcmp.lt.s32.totalorder %v2484, 0
        %v2490 = vand.u32 %v2484, 2139095040
        %v2491 = vshrl.u32 %v2490, 23
        %v2492 = vsub.s32 %v2491, 127
        %v2493 = vand.u32 2147483647, %v2484
        %v2494 = vand.u32 %v2493, 8388607
        %v2495 = vor.u32 %v2494, 8388608
        %v2496 = vsub.s32 0, %v2495
        %v2497 = vadd.s32 %v2492, 1
        %vm2498 = vcmp.gt.s32.totalorder %v2497, 0
        %v2499 = vsel %vm2498, %v2497, 0
        %v2500 = vshrl.u32 %v2499, 5
        %v2501 = vand.u32 %v2499, 31
        %v2502 = vsub.s32 32, %v2501
        %v2503 = vshrl.u32 683565275, %v2502
        %v2504 = vshll.u32 683565275, %v2501
        %v2505 = vshrl.u32 2475754826, %v2502
        %v2506 = vor.u32 %v2504, %v2505
        %v2507 = vshll.u32 2475754826, %v2501
        %v2508 = vshrl.u32 2131351028, %v2502
        %v2509 = vor.u32 %v2507, %v2508
        %v2510 = vshll.u32 2131351028, %v2501
        %v2511 = vshrl.u32 2102212464, %v2502
        %v2512 = vor.u32 %v2510, %v2511
        %v2513 = vshll.u32 2102212464, %v2501
        %v2514 = vshrl.u32 920167782, %v2502
        %v2515 = vor.u32 %v2513, %v2514
        %v2516 = vshll.u32 920167782, %v2501
        %v2517 = vshrl.u32 1326507024, %v2502
        %v2518 = vor.u32 %v2516, %v2517
        %vm2519 = vcmp.lt.s32.totalorder %v2500, 1
        %vm2520 = vcmp.lt.s32.totalorder %v2500, 2
        %vm2521 = vcmp.lt.s32.totalorder %v2500, 3
        %vm2522 = vcmp.lt.s32.totalorder %v2500, 4
        %v2523 = vsel %vm2519, %v2503, %v2506
        %v2524 = vsel %vm2522, %v2512, 2102212464
        %v2525 = vsel %vm2521, %v2509, %v2524
        %v2526 = vsel %vm2520, %v2523, %v2525
        %v2527 = vsel %vm2519, %v2506, %v2509
        %v2528 = vsel %vm2522, %v2515, 920167782
        %v2529 = vsel %vm2521, %v2512, %v2528
        %v2530 = vsel %vm2520, %v2527, %v2529
        %v2531 = vsel %vm2519, %v2509, %v2512
        %v2532 = vsel %vm2522, %v2518, 1326507024
        %v2533 = vsel %vm2521, %v2515, %v2532
        %v2534 = vsel %vm2520, %v2531, %v2533
        %v2535 = vshll.u32 %v2495, 8
        %v2536 = vmul.u32.u64.compose %v2535, %v2534
        %v2537 = vextract.low.u32 %v2536
        %v2538 = vextract.high.u32 %v2536
        %v2539 = vmul.u32.u64.compose %v2535, %v2530
        %v2540 = vextract.low.u32 %v2539
        %v2541 = vextract.high.u32 %v2539
        %v2542 = vmul.u32 %v2535, %v2526
        %v2543 = vadd.s32 %v2538, %v2540
        %vm2544 = vc.u32 %v2538, %v2540
        %v2545 = vadd.s32 %v2541, 1
        %v2546 = vsel %vm2544, %v2545, %v2541
        %v2547 = vadd.s32 %v2542, %v2546
        %v2548 = vadd.s32 %v2547, 536870912
        %v2549 = vshrl.u32 %v2548, 30
        %v2550 = vshll.u32 %v2549, 30
        %v2551 = vsub.s32 %v2547, %v2550
        %vm2552 = vcmp.lt.s32.totalorder %v2551, 0
        %v2553 = vsub.s32 0, %v2551
        %v2554 = vsel %vm2552, %v2553, %v2551
        %v2555 = vclz %v2554
        %v2556 = vsub.s32 %v2555, 2
        %vm2557 = vcmp.gt.s32.totalorder 0, %v2556
        %v2558 = vsel %vm2557, 0, %v2556
        %v2559 = vsub.s32 32, %v2558
        %v2560 = vshll.u32 %v2551, %v2558
        %v2561 = vshrl.u32 %v2543, %v2559
        %v2562 = vor.u32 %v2560, %v2561
        %v2563 = vsub.s32 4294967266, %v2558
        %v2564 = vadd.s32 %v2563, 127
        %v2565 = vshll.u32 %v2564, 23
        %v2566 = vor.u32 4788187, %v2565
        %v2567 = vand.u32 2147483647, %v2566
        %v2569 = vcvt.s32.f32 %v2562
        %v2570 = vmul.f32 %v2569, %v2567
        %v2571 = vxor.u32 %v2570, 2147483648
        %v2572 = vsel %vm2489, %v2571, %v2570
        %v2573 = vsub.s32 4, %v2549
        %v2574 = vsel %vm2489, %v2573, %v2549
        %v2575 = vsel %vm2488, %v2484, %v2572
        %v2576 = vsel %vm2488, 0, %v2574
        %v2577 = vcosq.f32.pop %v2575
        %v2578 = vsinq.f32.pop %v2575
        %vm2579 = vweird.f32 %v2484
        %v2580 = vadd.s32 %v2576, 3
        %v2581 = vand.u32 %v2580, 3
        %vm2582 = vcmp.lt.s32.totalorder %v2581, 2
        %vm2583 = vcmp.eq.s32.totalorder %v2581, 0
        %v2584 = vxor.u32 %v2578, 2147483648
        %v2585 = vsel %vm2583, %v2577, %v2584
        %vm2586 = vcmp.eq.s32.totalorder %v2581, 2
        %v2587 = vxor.u32 %v2577, 2147483648
        %v2588 = vsel %vm2586, %v2587, %v2578
        %v2589 = vsel %vm2582, %v2585, %v2588
        %v2590 = vsel %vm2579, nan, %v2589
        %2591 = vst [vmem:[%s269] sm:$0x7] %v2590
        %s2592 = sand.u32 %s181, 1
        %s2593 = scalar_lea.sflag [#allocation3], %s2592
        %s2594 = sand.u32 %s181, 1
        %s2595 = smul.addr %s2594, 4
        %s2596 = scalar_lea.vmem [#allocation2], %s2595
        // Predicated region
        $region49: #{tpu_custom_call.1} parent=47 // pred_check
          %p2597 = pneg %p191
        $region50: #{tpu_custom_call.1} parent=47 // pred_check_branch
          %2599 = sbr.rel (%p2597) target = $region52
        $region51: #{tpu_custom_call.1} parent=47 // pred_region
          %s2601 = ssub.s32 64, 64
          %2602 = vsyncadd %s2593, %s2601
          %s2603 = smul.addr %s21, 64
          %s2604 = scalar_lea.hbm %s7, %s2603
          %s2606 = sshll.u32 %s2596, 4
          %s2607 = int_to_ptr.vmem [resolvable:$true] %s2606
          %2609 = dma.vmem_to_hbm [thread:$0]  %s2607, 64, %s2604, %s2593
        $region52: #{tpu_custom_call.1} parent=47 // pred_fallthru
          _
      $region48: #{tpu_custom_call.1} parent=5 // pred_fallthru
        _
      %p2610 = scmp.le.s32.totalorder 2, %s16
      // Predicated region
      $region53: #{tpu_custom_call.1} parent=5 // pred_check
        %p2611 = pneg %p2610
      $region54: #{tpu_custom_call.1} parent=5 // pred_check_branch
        %2613 = sbr.rel (%p2611) target = $region56
      $region55: #{tpu_custom_call.1} parent=5 // pred_region
        %s2614 = ssub.s32 %s16, 2
        // Predicated region
        $region57: #{tpu_custom_call.1} parent=55 // pred_check
          %p2615 = pneg %p197
        $region58: #{tpu_custom_call.1} parent=55 // pred_check_branch
          %2617 = sbr.rel (%p2615) target = $region60
        $region59: #{tpu_custom_call.1} parent=55 // pred_region
          %s2618 = sand.u32 %s182, 1
          %s2619 = scalar_lea.sflag [#allocation3], %s2618
          %s2620 = sand.u32 %s182, 1
          %s2621 = smul.addr %s2620, 4
          %s2622 = scalar_lea.vmem [#allocation2], %s2621
          %2623 = dma.done %s2619, 64
        $region60: #{tpu_custom_call.1} parent=55 // pred_fallthru
          _
      $region56: #{tpu_custom_call.1} parent=5 // pred_fallthru
        _
    $region6: #{tpu_custom_call.1} parent=1 // loop_footer
      %s20 = sadd.s32 1, %s16
    $region7: #{tpu_custom_call.1} parent=1 // loop_footer_branch
      %15 = sbr.rel target = $region3
    $region8: #{tpu_custom_call.1} parent=1 // loop_exit
      _
    %2624 = vsyncpa [#allocation3], 1
    %s2625 = scalar_lea.sflag [#allocation3], 1
    %2626 = vsyncpa %s2625, 1

</llo_original>
